<compile_context>
chip_gen: v5e
topology: v5e:2x2
jax: 0.10.0
libtpu: 0.0.40
codegen_flags: <defaults>
</compile_context>

<pallas_src>
import jax
import jax.numpy as jnp
import numpy as np
from jax.experimental import pallas as pl
from jax.experimental.pallas import tpu as pltpu


def _lstm_attn_kernel(x_ref, len_ref,
                      wih_ref, b_ih_ref,
                      whh_f_ref, whh_b_ref,
                      wproj_ref, bproj_ref, ctx_ref,
                      wlin_ref, blin_ref, wout_ref, bout_ref,
                      out_ref, xf_scr, xb_scr):
    # x_ref:    (T, Bt, E)  bf16 time-major embedded input (batch tile Bt)
    # len_ref:  (Bt, 1) int32 sequence lengths (0 for padded batch rows)
    # wih_ref:  (E, 8H) bf16  [fwd i,f,g,o | bwd i,f,g,o], b_ih_ref (1, 8H) f32
    # whh_*:    (H, 4H) bf16
    # wproj (2H,2H) bf16, bproj (1,2H) f32, ctx (1,2H) f32
    # wlin (2H,2H) bf16, blin (1,2H) f32, wout (2H,n_label) bf16, bout (1,n) f32
    # out_ref:  (Bt, n_label) f32
    # xf_scr / xb_scr: (T, Bt, H) f32 VMEM scratch for the two direction traces
    T, Bt, E = x_ref.shape
    H = whh_f_ref.shape[0]
    H4 = 4 * H

    lengths = len_ref[...]                                    # (Bt, 1) int32

    # Validity mask over time, built once: (T, Bt, 1), True where t < length.
    t_iota = jax.lax.broadcasted_iota(jnp.int32, (T, Bt, 1), 0)
    valid = t_iota < lengths[None, :, :]                      # bool
    valid_f = valid.astype(jnp.float32)

    # ---- hoisted input projection: BOTH directions in one MXU push ----
    x2 = x_ref[...].reshape(T * Bt, E)                        # bf16
    gi = (jnp.dot(x2, wih_ref[...], preferred_element_type=jnp.float32)
          + b_ih_ref[...]).reshape(T, Bt, 2 * H4)             # (T, Bt, 8H) f32
    gi_f = gi[:, :, :H4]                                      # lane-aligned split
    gi_b = gi[:, :, H4:]

    whh_f = whh_f_ref[...]                                    # bf16
    whh_b = whh_b_ref[...]

    def cell(g_pre, h, c, whh):
        gates = g_pre + jnp.dot(h.astype(jnp.bfloat16), whh,
                                preferred_element_type=jnp.float32)  # (Bt, 4H)
        # Full-vreg nonlinearities (one sigmoid + one tanh push), then slice.
        sg = jax.nn.sigmoid(gates)
        th = jnp.tanh(gates)
        i = sg[:, 0:H]
        f = sg[:, H:2 * H]
        o = sg[:, 3 * H:4 * H]
        g = th[:, 2 * H:3 * H]
        c_new = f * c + i * g
        h_new = o * jnp.tanh(c_new)
        return h_new, c_new

    h_f = jnp.zeros((Bt, H), jnp.float32)
    c_f = jnp.zeros((Bt, H), jnp.float32)
    h_b = jnp.zeros((Bt, H), jnp.float32)
    c_b = jnp.zeros((Bt, H), jnp.float32)

    # ---- single fused time loop: fwd step t=s, bwd step t=T-1-s ----
    for s in range(T):
        tb = T - 1 - s
        hf_new, cf_new = cell(gi_f[s], h_f, c_f, whh_f)
        hb_new, cb_new = cell(gi_b[tb], h_b, c_b, whh_b)
        v_f = valid[s]                                        # (Bt, 1) bool
        v_b = valid[tb]
        h_f = jnp.where(v_f, hf_new, h_f)                     # freeze past length
        c_f = jnp.where(v_f, cf_new, c_f)
        h_b = jnp.where(v_b, hb_new, h_b)                     # stays 0 until valid
        c_b = jnp.where(v_b, cb_new, c_b)
        xf_scr[s] = h_f                                       # store trace to VMEM
        xb_scr[tb] = h_b

    # Bidirectional trace; zero padded steps once (pad_packed semantics).
    x_out = jnp.concatenate([xf_scr[...], xb_scr[...]], axis=2) * valid_f  # (T,Bt,2H)

    # ---- attention over time (softmax includes padded steps, as in torch) ----
    xo2 = x_out.reshape(T * Bt, 2 * H).astype(jnp.bfloat16)
    hw = jnp.tanh(
        jnp.dot(xo2, wproj_ref[...], preferred_element_type=jnp.float32)
        + bproj_ref[...])                                     # (T*Bt, 2H)
    hw3 = hw.reshape(T, Bt, 2 * H)
    score = jnp.sum(hw3 * ctx_ref[...], axis=2, keepdims=True)    # (T, Bt, 1)

    m_s = jnp.max(score, axis=0, keepdims=True)               # softmax over time
    e = jnp.exp(score - m_s)
    denom = jnp.sum(e, axis=0, keepdims=True)
    w = e * pl.reciprocal(denom, approx=True)                 # (T, Bt, 1)

    weighted = jnp.sum(x_out * w, axis=0)                     # (Bt, 2H)

    # ---- head: relu(linear) -> linear_out -> sigmoid, single store ----
    z = jnp.maximum(
        jnp.dot(weighted.astype(jnp.bfloat16), wlin_ref[...],
                preferred_element_type=jnp.float32) + blin_ref[...], 0.0)
    logits = (jnp.dot(z.astype(jnp.bfloat16), wout_ref[...],
                      preferred_element_type=jnp.float32) + bout_ref[...])
    out_ref[...] = jax.nn.sigmoid(logits)                     # (Bt, n_label)


def lstm_attn_pallas(x_tokens, lengths, p, *, btile=None):
    """x_tokens: (B, T) int32, lengths: (B,) int32 -> (B, n_label) f32."""
    B, T = x_tokens.shape
    E = p["embed"].shape[1]
    H = p["whh_f_t"].shape[0]
    n_label = p["wout_t"].shape[1]

    # Batch tile: multiple of the f32 sublane tile (8), capped at 128 so large
    # batches shard over the grid (parallel axis -> both TensorCores on v7x).
    if btile is None:
        btile = min(128, 8 * ((B + 7) // 8))
    n_tiles = (B + btile - 1) // btile
    Bp = n_tiles * btile
    pad = Bp - B

    toks = jnp.pad(x_tokens, ((0, pad), (0, 0)), constant_values=1)
    lens = jnp.pad(lengths.astype(jnp.int32), (0, pad)).reshape(Bp, 1)

    # Embedding gather (glue, plain JAX), then time-major; bf16 matmul operand.
    emb = p["embed"][toks]                                    # (Bp, T, E)
    x_tm = jnp.transpose(emb, (1, 0, 2)).astype(jnp.bfloat16)  # (T, Bp, E)

    bf = lambda a: a.astype(jnp.bfloat16)
    # Merge both directions' input projections into one (E, 8H) operand.
    wih_cat = bf(jnp.concatenate([p["wih_f_t"], p["wih_b_t"]], axis=1))
    b_cat = jnp.concatenate([p["b_f"], p["b_b"]], axis=1)     # (1, 8H) f32

    weights = [wih_cat, b_cat,
               bf(p["whh_f_t"]), bf(p["whh_b_t"]),
               bf(p["wproj_t"]), p["bproj"], p["ctx_row"],
               bf(p["wlin_t"]), p["blin"], bf(p["wout_t"]), p["bout"]]

    def full_spec(a):
        return pl.BlockSpec(a.shape, lambda b: (0,) * a.ndim)

    out = pl.pallas_call(
        _lstm_attn_kernel,
        out_shape=jax.ShapeDtypeStruct((Bp, n_label), jnp.float32),
        grid=(n_tiles,),
        in_specs=[pl.BlockSpec((T, btile, E), lambda b: (0, b, 0)),
                  pl.BlockSpec((btile, 1), lambda b: (b, 0))]
                 + [full_spec(w) for w in weights],
        out_specs=pl.BlockSpec((btile, n_label), lambda b: (b, 0)),
        scratch_shapes=[pltpu.VMEM((T, btile, H), jnp.float32),
                        pltpu.VMEM((T, btile, H), jnp.float32)],
        compiler_params=pltpu.CompilerParams(
            dimension_semantics=("parallel",),
            vmem_limit_bytes=32 * 1024 * 1024),
    )(x_tm, lens, *weights)
    return out[:B]


def lstm_attn_ref(x_tokens, lengths, p):
    """Pure-JAX f32 reference mirroring the PyTorch forward (for verification)."""
    B, T = x_tokens.shape
    H = p["whh_f_t"].shape[0]
    emb = p["embed"][x_tokens].astype(jnp.float32)            # (B, T, E)
    lens = lengths.reshape(B, 1)

    def cell(x_t, h, c, wih_t, whh_t, b):
        gates = x_t @ wih_t + h @ whh_t + b
        i = jax.nn.sigmoid(gates[:, 0:H])
        f = jax.nn.sigmoid(gates[:, H:2 * H])
        g = jnp.tanh(gates[:, 2 * H:3 * H])
        o = jax.nn.sigmoid(gates[:, 3 * H:4 * H])
        c_new = f * c + i * g
        return o * jnp.tanh(c_new), c_new

    h = jnp.zeros((B, H), jnp.float32)
    c = jnp.zeros((B, H), jnp.float32)
    outs_f = []
    for t in range(T):
        m = (lens > t).astype(jnp.float32)
        hn, cn = cell(emb[:, t], h, c, p["wih_f_t"], p["whh_f_t"], p["b_f"])
        h = m * hn + (1.0 - m) * h
        c = m * cn + (1.0 - m) * c
        outs_f.append(h * m)

    h = jnp.zeros((B, H), jnp.float32)
    c = jnp.zeros((B, H), jnp.float32)
    outs_b = [None] * T
    for t in range(T - 1, -1, -1):
        m = (lens > t).astype(jnp.float32)
        hn, cn = cell(emb[:, t], h, c, p["wih_b_t"], p["whh_b_t"], p["b_b"])
        h = m * hn + (1.0 - m) * h
        c = m * cn + (1.0 - m) * c
        outs_b[t] = h * m

    x_out = jnp.stack(
        [jnp.concatenate([outs_f[t], outs_b[t]], axis=1) for t in range(T)],
        axis=1)                                               # (B, T, 2H)

    hw = jnp.tanh(x_out @ p["wproj_t"] + p["bproj"])
    score = jnp.sum(hw * p["ctx_row"], axis=-1, keepdims=True)    # (B, T, 1)
    w = jax.nn.softmax(score, axis=1)
    weighted = jnp.sum(x_out * w, axis=1)                     # (B, 2H)
    z = jax.nn.relu(weighted @ p["wlin_t"] + p["blin"])
    logits = z @ p["wout_t"] + p["bout"]
    return jax.nn.sigmoid(logits)


def init_params(key, vocab, E, H, n_label):
    ks = jax.random.split(key, 14)
    s = 0.1
    embed = (jax.random.normal(ks[0], (vocab, E), jnp.float32) * s).at[1].set(0.0)
    g = lambda k, shape, scale=s: jax.random.normal(k, shape, jnp.float32) * scale
    return dict(
        embed=embed,
        # LSTM, gate order i,f,g,o; weights pre-transposed, biases combined
        wih_f_t=g(ks[1], (E, 4 * H)), whh_f_t=g(ks[2], (H, 4 * H)),
        b_f=g(ks[3], (1, 4 * H)),
        wih_b_t=g(ks[4], (E, 4 * H)), whh_b_t=g(ks[5], (H, 4 * H)),
        b_b=g(ks[6], (1, 4 * H)),
        wproj_t=g(ks[7], (2 * H, 2 * H)), bproj=g(ks[8], (1, 2 * H)),
        ctx_row=jax.random.normal(ks[9], (1, 2 * H), jnp.float32),   # torch.randn
        wlin_t=g(ks[10], (2 * H, 2 * H)), blin=g(ks[11], (1, 2 * H)),
        wout_t=g(ks[12], (2 * H, n_label)), bout=g(ks[13], (1, n_label)),
    )


if __name__ == "__main__":
    key = jax.random.PRNGKey(0)
    B, T = 2, 8               # batch, max_l
    vocab, E, H = 50, 16, 32  # vocab_size, embedding_size, hidden_size
    n_label = 3

    p = init_params(key, vocab, E, H, n_label)

    kx, _ = jax.random.split(key)
    lengths = jnp.array([8, 5], jnp.int32)
    toks = jax.random.randint(kx, (B, T), 2, vocab, dtype=jnp.int32)
    # padded positions carry the padding token (idx 1), as a padded batch would
    tpos = jnp.arange(T)[None, :]
    toks = jnp.where(tpos < lengths[:, None], toks, 1)

    out = jax.block_until_ready(lstm_attn_pallas(toks, lengths, p))
    ref = lstm_attn_ref(toks, lengths, p)
    assert out.shape == (B, n_label)
    np.testing.assert_allclose(np.asarray(out), np.asarray(ref),
                               atol=2e-2, rtol=2e-2)
    print("KERNEL_OK")
</pallas_src>

<mosaic_0001>
module attributes {stable_mosaic.version = 11 : i64} {
  func.func @_lstm_attn_kernel(%arg0: i32, %arg1: memref<8x8x16xbf16, #tpu.memory_space<vmem>>, %arg2: memref<8x1xi32, #tpu.memory_space<vmem>>, %arg3: memref<16x256xbf16, #tpu.memory_space<vmem>>, %arg4: memref<1x256xf32, #tpu.memory_space<vmem>>, %arg5: memref<32x128xbf16, #tpu.memory_space<vmem>>, %arg6: memref<32x128xbf16, #tpu.memory_space<vmem>>, %arg7: memref<64x64xbf16, #tpu.memory_space<vmem>>, %arg8: memref<1x64xf32, #tpu.memory_space<vmem>>, %arg9: memref<1x64xf32, #tpu.memory_space<vmem>>, %arg10: memref<64x64xbf16, #tpu.memory_space<vmem>>, %arg11: memref<1x64xf32, #tpu.memory_space<vmem>>, %arg12: memref<64x3xbf16, #tpu.memory_space<vmem>>, %arg13: memref<1x3xf32, #tpu.memory_space<vmem>>, %arg14: memref<8x3xf32, #tpu.memory_space<vmem>>, %arg15: memref<8x8x32xf32, #tpu.memory_space<vmem>>, %arg16: memref<8x8x32xf32, #tpu.memory_space<vmem>>) attributes {dimension_semantics = [#tpu.dimension_semantics<parallel>], iteration_bounds = array<i64: 1>, scalar_prefetch = 0 : i64, scratch_operands = 2 : i64, tpu.core_type = #tpu.core_type<tc>, window_params = [{transform_indices = @transform_0, window_bounds = array<i64: 8, 8, 16>}, {transform_indices = @transform_1, window_bounds = array<i64: 8, 1>}, {pipeline_mode = #tpu.pipeline_mode<synchronous>, transform_indices = @transform_2, window_bounds = array<i64: 16, 256>}, {pipeline_mode = #tpu.pipeline_mode<synchronous>, transform_indices = @transform_3, window_bounds = array<i64: 1, 256>}, {pipeline_mode = #tpu.pipeline_mode<synchronous>, transform_indices = @transform_4, window_bounds = array<i64: 32, 128>}, {pipeline_mode = #tpu.pipeline_mode<synchronous>, transform_indices = @transform_5, window_bounds = array<i64: 32, 128>}, {pipeline_mode = #tpu.pipeline_mode<synchronous>, transform_indices = @transform_6, window_bounds = array<i64: 64, 64>}, {pipeline_mode = #tpu.pipeline_mode<synchronous>, transform_indices = @transform_7, window_bounds = array<i64: 1, 64>}, {pipeline_mode = #tpu.pipeline_mode<synchronous>, transform_indices = @transform_8, window_bounds = array<i64: 1, 64>}, {pipeline_mode = #tpu.pipeline_mode<synchronous>, transform_indices = @transform_9, window_bounds = array<i64: 64, 64>}, {pipeline_mode = #tpu.pipeline_mode<synchronous>, transform_indices = @transform_10, window_bounds = array<i64: 1, 64>}, {pipeline_mode = #tpu.pipeline_mode<synchronous>, transform_indices = @transform_11, window_bounds = array<i64: 64, 3>}, {pipeline_mode = #tpu.pipeline_mode<synchronous>, transform_indices = @transform_12, window_bounds = array<i64: 1, 3>}, {transform_indices = @transform_13, window_bounds = array<i64: 8, 3>}]} {
    %c0 = arith.constant 0 : index
    %c0_0 = arith.constant 0 : index
    %0 = vector.load %arg2[%c0, %c0_0] : memref<8x1xi32, #tpu.memory_space<vmem>>, vector<8x1xi32>
    %1 = tpu.iota {dimensions = array<i32: 0>} : vector<8x8x1xi32>
    %2 = vector.shape_cast %0 : vector<8x1xi32> to vector<1x8x1xi32>
    %3 = vector.broadcast %2 : vector<1x8x1xi32> to vector<8x8x1xi32>
    %4 = arith.cmpi slt, %1, %3 : vector<8x8x1xi32>
    %5 = arith.extui %4 : vector<8x8x1xi1> to vector<8x8x1xi32>
    %6 = arith.sitofp %5 : vector<8x8x1xi32> to vector<8x8x1xf32>
    %c0_1 = arith.constant 0 : index
    %c0_2 = arith.constant 0 : index
    %c0_3 = arith.constant 0 : index
    %7 = vector.load %arg1[%c0_1, %c0_2, %c0_3] : memref<8x8x16xbf16, #tpu.memory_space<vmem>>, vector<8x8x16xbf16>
    %8 = vector.shape_cast %7 : vector<8x8x16xbf16> to vector<64x16xbf16>
    %c0_4 = arith.constant 0 : index
    %c0_5 = arith.constant 0 : index
    %9 = vector.load %arg3[%c0_4, %c0_5] : memref<16x256xbf16, #tpu.memory_space<vmem>>, vector<16x256xbf16>
    %cst = arith.constant dense<0.000000e+00> : vector<64x256xf32>
    %10 = tpu.matmul %8, %9, %cst {dimension_numbers = #tpu.dot_dimension_numbers<[1], [0], [0], [1], [0, 0, 1, 1], [], []>} : vector<64x16xbf16>, vector<16x256xbf16>, vector<64x256xf32> -> vector<64x256xf32>
    %c0_6 = arith.constant 0 : index
    %c0_7 = arith.constant 0 : index
    %11 = vector.load %arg4[%c0_6, %c0_7] : memref<1x256xf32, #tpu.memory_space<vmem>>, vector<1x256xf32>
    %12 = vector.broadcast %11 : vector<1x256xf32> to vector<64x256xf32>
    %13 = arith.addf %10, %12 : vector<64x256xf32>
    %14 = vector.shape_cast %13 : vector<64x256xf32> to vector<8x8x256xf32>
    %15 = vector.extract_strided_slice %14 {offsets = [0, 0, 0], sizes = [8, 8, 128], strides = [1, 1, 1]} : vector<8x8x256xf32> to vector<8x8x128xf32>
    %16 = vector.extract_strided_slice %14 {offsets = [0, 0, 128], sizes = [8, 8, 128], strides = [1, 1, 1]} : vector<8x8x256xf32> to vector<8x8x128xf32>
    %c0_8 = arith.constant 0 : index
    %c0_9 = arith.constant 0 : index
    %17 = vector.load %arg5[%c0_8, %c0_9] : memref<32x128xbf16, #tpu.memory_space<vmem>>, vector<32x128xbf16>
    %c0_10 = arith.constant 0 : index
    %c0_11 = arith.constant 0 : index
    %18 = vector.load %arg6[%c0_10, %c0_11] : memref<32x128xbf16, #tpu.memory_space<vmem>>, vector<32x128xbf16>
    %cst_12 = arith.constant 0.000000e+00 : f32
    %19 = vector.broadcast %cst_12 : f32 to vector<8x32xf32>
    %cst_13 = arith.constant 0.000000e+00 : f32
    %20 = vector.broadcast %cst_13 : f32 to vector<8x32xf32>
    %cst_14 = arith.constant 0.000000e+00 : f32
    %21 = vector.broadcast %cst_14 : f32 to vector<8x32xf32>
    %cst_15 = arith.constant 0.000000e+00 : f32
    %22 = vector.broadcast %cst_15 : f32 to vector<8x32xf32>
    %23 = vector.extract_strided_slice %15 {offsets = [0, 0, 0], sizes = [1, 8, 128], strides = [1, 1, 1]} : vector<8x8x128xf32> to vector<1x8x128xf32>
    %24 = vector.shape_cast %23 : vector<1x8x128xf32> to vector<8x128xf32>
    %25 = arith.truncf %19 : vector<8x32xf32> to vector<8x32xbf16>
    %cst_16 = arith.constant dense<0.000000e+00> : vector<8x128xf32>
    %26 = tpu.matmul %25, %17, %cst_16 {dimension_numbers = #tpu.dot_dimension_numbers<[1], [0], [0], [1], [0, 0, 1, 1], [], []>} : vector<8x32xbf16>, vector<32x128xbf16>, vector<8x128xf32> -> vector<8x128xf32>
    %27 = arith.addf %24, %26 : vector<8x128xf32>
    %28 = arith.negf %27 : vector<8x128xf32>
    %29 = math.exp %28 : vector<8x128xf32>
    %cst_17 = arith.constant 1.000000e+00 : f32
    %30 = vector.broadcast %cst_17 : f32 to vector<8x128xf32>
    %31 = arith.addf %30, %29 : vector<8x128xf32>
    %32 = arith.divf %30, %31 : vector<8x128xf32>
    %33 = math.tanh %27 : vector<8x128xf32>
    %34 = vector.extract_strided_slice %32 {offsets = [0, 0], sizes = [8, 32], strides = [1, 1]} : vector<8x128xf32> to vector<8x32xf32>
    %35 = vector.extract_strided_slice %32 {offsets = [0, 32], sizes = [8, 32], strides = [1, 1]} : vector<8x128xf32> to vector<8x32xf32>
    %36 = vector.extract_strided_slice %32 {offsets = [0, 96], sizes = [8, 32], strides = [1, 1]} : vector<8x128xf32> to vector<8x32xf32>
    %37 = vector.extract_strided_slice %33 {offsets = [0, 64], sizes = [8, 32], strides = [1, 1]} : vector<8x128xf32> to vector<8x32xf32>
    %38 = arith.mulf %35, %20 : vector<8x32xf32>
    %39 = arith.mulf %34, %37 : vector<8x32xf32>
    %40 = arith.addf %38, %39 : vector<8x32xf32>
    %41 = math.tanh %40 : vector<8x32xf32>
    %42 = arith.mulf %36, %41 : vector<8x32xf32>
    %43 = vector.extract_strided_slice %16 {offsets = [7, 0, 0], sizes = [1, 8, 128], strides = [1, 1, 1]} : vector<8x8x128xf32> to vector<1x8x128xf32>
    %44 = vector.shape_cast %43 : vector<1x8x128xf32> to vector<8x128xf32>
    %45 = arith.truncf %21 : vector<8x32xf32> to vector<8x32xbf16>
    %cst_18 = arith.constant dense<0.000000e+00> : vector<8x128xf32>
    %46 = tpu.matmul %45, %18, %cst_18 {dimension_numbers = #tpu.dot_dimension_numbers<[1], [0], [0], [1], [0, 0, 1, 1], [], []>} : vector<8x32xbf16>, vector<32x128xbf16>, vector<8x128xf32> -> vector<8x128xf32>
    %47 = arith.addf %44, %46 : vector<8x128xf32>
    %48 = arith.negf %47 : vector<8x128xf32>
    %49 = math.exp %48 : vector<8x128xf32>
    %cst_19 = arith.constant 1.000000e+00 : f32
    %50 = vector.broadcast %cst_19 : f32 to vector<8x128xf32>
    %51 = arith.addf %50, %49 : vector<8x128xf32>
    %52 = arith.divf %50, %51 : vector<8x128xf32>
    %53 = math.tanh %47 : vector<8x128xf32>
    %54 = vector.extract_strided_slice %52 {offsets = [0, 0], sizes = [8, 32], strides = [1, 1]} : vector<8x128xf32> to vector<8x32xf32>
    %55 = vector.extract_strided_slice %52 {offsets = [0, 32], sizes = [8, 32], strides = [1, 1]} : vector<8x128xf32> to vector<8x32xf32>
    %56 = vector.extract_strided_slice %52 {offsets = [0, 96], sizes = [8, 32], strides = [1, 1]} : vector<8x128xf32> to vector<8x32xf32>
    %57 = vector.extract_strided_slice %53 {offsets = [0, 64], sizes = [8, 32], strides = [1, 1]} : vector<8x128xf32> to vector<8x32xf32>
    %58 = arith.mulf %55, %22 : vector<8x32xf32>
    %59 = arith.mulf %54, %57 : vector<8x32xf32>
    %60 = arith.addf %58, %59 : vector<8x32xf32>
    %61 = math.tanh %60 : vector<8x32xf32>
    %62 = arith.mulf %56, %61 : vector<8x32xf32>
    %63 = vector.extract_strided_slice %4 {offsets = [0, 0, 0], sizes = [1, 8, 1], strides = [1, 1, 1]} : vector<8x8x1xi1> to vector<1x8x1xi1>
    %64 = vector.shape_cast %63 : vector<1x8x1xi1> to vector<8x1xi1>
    %65 = vector.extract_strided_slice %4 {offsets = [7, 0, 0], sizes = [1, 8, 1], strides = [1, 1, 1]} : vector<8x8x1xi1> to vector<1x8x1xi1>
    %66 = vector.shape_cast %65 : vector<1x8x1xi1> to vector<8x1xi1>
    %67 = vector.shape_cast %64 : vector<8x1xi1> to vector<8x1xi1>
    %68 = vector.broadcast %67 : vector<8x1xi1> to vector<8x32xi1>
    %69 = arith.select %68, %42, %19 : vector<8x32xi1>, vector<8x32xf32>
    %70 = vector.shape_cast %64 : vector<8x1xi1> to vector<8x1xi1>
    %71 = vector.broadcast %70 : vector<8x1xi1> to vector<8x32xi1>
    %72 = arith.select %71, %40, %20 : vector<8x32xi1>, vector<8x32xf32>
    %73 = vector.shape_cast %66 : vector<8x1xi1> to vector<8x1xi1>
    %74 = vector.broadcast %73 : vector<8x1xi1> to vector<8x32xi1>
    %75 = arith.select %74, %62, %21 : vector<8x32xi1>, vector<8x32xf32>
    %76 = vector.shape_cast %66 : vector<8x1xi1> to vector<8x1xi1>
    %77 = vector.broadcast %76 : vector<8x1xi1> to vector<8x32xi1>
    %78 = arith.select %77, %60, %22 : vector<8x32xi1>, vector<8x32xf32>
    %c0_20 = arith.constant 0 : index
    %c0_21 = arith.constant 0 : index
    %c0_22 = arith.constant 0 : index
    %79 = vector.load %arg15[%c0_20, %c0_21, %c0_22] : memref<8x8x32xf32, #tpu.memory_space<vmem>>, vector<1x8x32xf32>
    %80 = vector.shape_cast %79 : vector<1x8x32xf32> to vector<8x32xf32>
    %81 = vector.shape_cast %69 : vector<8x32xf32> to vector<1x8x32xf32>
    tpu.vector_store %arg15[%c0_20, %c0_21, %c0_22], %81 {strides = array<i32>} : memref<8x8x32xf32, #tpu.memory_space<vmem>>, vector<1x8x32xf32>,
    %c7 = arith.constant 7 : index
    %c0_23 = arith.constant 0 : index
    %c0_24 = arith.constant 0 : index
    %82 = vector.load %arg16[%c7, %c0_23, %c0_24] : memref<8x8x32xf32, #tpu.memory_space<vmem>>, vector<1x8x32xf32>
    %83 = vector.shape_cast %82 : vector<1x8x32xf32> to vector<8x32xf32>
    %84 = vector.shape_cast %75 : vector<8x32xf32> to vector<1x8x32xf32>
    tpu.vector_store %arg16[%c7, %c0_23, %c0_24], %84 {strides = array<i32>} : memref<8x8x32xf32, #tpu.memory_space<vmem>>, vector<1x8x32xf32>,
    %85 = vector.extract_strided_slice %15 {offsets = [1, 0, 0], sizes = [1, 8, 128], strides = [1, 1, 1]} : vector<8x8x128xf32> to vector<1x8x128xf32>
    %86 = vector.shape_cast %85 : vector<1x8x128xf32> to vector<8x128xf32>
    %87 = arith.truncf %69 : vector<8x32xf32> to vector<8x32xbf16>
    %cst_25 = arith.constant dense<0.000000e+00> : vector<8x128xf32>
    %88 = tpu.matmul %87, %17, %cst_25 {dimension_numbers = #tpu.dot_dimension_numbers<[1], [0], [0], [1], [0, 0, 1, 1], [], []>} : vector<8x32xbf16>, vector<32x128xbf16>, vector<8x128xf32> -> vector<8x128xf32>
    %89 = arith.addf %86, %88 : vector<8x128xf32>
    %90 = arith.negf %89 : vector<8x128xf32>
    %91 = math.exp %90 : vector<8x128xf32>
    %cst_26 = arith.constant 1.000000e+00 : f32
    %92 = vector.broadcast %cst_26 : f32 to vector<8x128xf32>
    %93 = arith.addf %92, %91 : vector<8x128xf32>
    %94 = arith.divf %92, %93 : vector<8x128xf32>
    %95 = math.tanh %89 : vector<8x128xf32>
    %96 = vector.extract_strided_slice %94 {offsets = [0, 0], sizes = [8, 32], strides = [1, 1]} : vector<8x128xf32> to vector<8x32xf32>
    %97 = vector.extract_strided_slice %94 {offsets = [0, 32], sizes = [8, 32], strides = [1, 1]} : vector<8x128xf32> to vector<8x32xf32>
    %98 = vector.extract_strided_slice %94 {offsets = [0, 96], sizes = [8, 32], strides = [1, 1]} : vector<8x128xf32> to vector<8x32xf32>
    %99 = vector.extract_strided_slice %95 {offsets = [0, 64], sizes = [8, 32], strides = [1, 1]} : vector<8x128xf32> to vector<8x32xf32>
    %100 = arith.mulf %97, %72 : vector<8x32xf32>
    %101 = arith.mulf %96, %99 : vector<8x32xf32>
    %102 = arith.addf %100, %101 : vector<8x32xf32>
    %103 = math.tanh %102 : vector<8x32xf32>
    %104 = arith.mulf %98, %103 : vector<8x32xf32>
    %105 = vector.extract_strided_slice %16 {offsets = [6, 0, 0], sizes = [1, 8, 128], strides = [1, 1, 1]} : vector<8x8x128xf32> to vector<1x8x128xf32>
    %106 = vector.shape_cast %105 : vector<1x8x128xf32> to vector<8x128xf32>
    %107 = arith.truncf %75 : vector<8x32xf32> to vector<8x32xbf16>
    %cst_27 = arith.constant dense<0.000000e+00> : vector<8x128xf32>
    %108 = tpu.matmul %107, %18, %cst_27 {dimension_numbers = #tpu.dot_dimension_numbers<[1], [0], [0], [1], [0, 0, 1, 1], [], []>} : vector<8x32xbf16>, vector<32x128xbf16>, vector<8x128xf32> -> vector<8x128xf32>
    %109 = arith.addf %106, %108 : vector<8x128xf32>
    %110 = arith.negf %109 : vector<8x128xf32>
    %111 = math.exp %110 : vector<8x128xf32>
    %cst_28 = arith.constant 1.000000e+00 : f32
    %112 = vector.broadcast %cst_28 : f32 to vector<8x128xf32>
    %113 = arith.addf %112, %111 : vector<8x128xf32>
    %114 = arith.divf %112, %113 : vector<8x128xf32>
    %115 = math.tanh %109 : vector<8x128xf32>
    %116 = vector.extract_strided_slice %114 {offsets = [0, 0], sizes = [8, 32], strides = [1, 1]} : vector<8x128xf32> to vector<8x32xf32>
    %117 = vector.extract_strided_slice %114 {offsets = [0, 32], sizes = [8, 32], strides = [1, 1]} : vector<8x128xf32> to vector<8x32xf32>
    %118 = vector.extract_strided_slice %114 {offsets = [0, 96], sizes = [8, 32], strides = [1, 1]} : vector<8x128xf32> to vector<8x32xf32>
    %119 = vector.extract_strided_slice %115 {offsets = [0, 64], sizes = [8, 32], strides = [1, 1]} : vector<8x128xf32> to vector<8x32xf32>
    %120 = arith.mulf %117, %78 : vector<8x32xf32>
    %121 = arith.mulf %116, %119 : vector<8x32xf32>
    %122 = arith.addf %120, %121 : vector<8x32xf32>
    %123 = math.tanh %122 : vector<8x32xf32>
    %124 = arith.mulf %118, %123 : vector<8x32xf32>
    %125 = vector.extract_strided_slice %4 {offsets = [1, 0, 0], sizes = [1, 8, 1], strides = [1, 1, 1]} : vector<8x8x1xi1> to vector<1x8x1xi1>
    %126 = vector.shape_cast %125 : vector<1x8x1xi1> to vector<8x1xi1>
    %127 = vector.extract_strided_slice %4 {offsets = [6, 0, 0], sizes = [1, 8, 1], strides = [1, 1, 1]} : vector<8x8x1xi1> to vector<1x8x1xi1>
    %128 = vector.shape_cast %127 : vector<1x8x1xi1> to vector<8x1xi1>
    %129 = vector.shape_cast %126 : vector<8x1xi1> to vector<8x1xi1>
    %130 = vector.broadcast %129 : vector<8x1xi1> to vector<8x32xi1>
    %131 = arith.select %130, %104, %69 : vector<8x32xi1>, vector<8x32xf32>
    %132 = vector.shape_cast %126 : vector<8x1xi1> to vector<8x1xi1>
    %133 = vector.broadcast %132 : vector<8x1xi1> to vector<8x32xi1>
    %134 = arith.select %133, %102, %72 : vector<8x32xi1>, vector<8x32xf32>
    %135 = vector.shape_cast %128 : vector<8x1xi1> to vector<8x1xi1>
    %136 = vector.broadcast %135 : vector<8x1xi1> to vector<8x32xi1>
    %137 = arith.select %136, %124, %75 : vector<8x32xi1>, vector<8x32xf32>
    %138 = vector.shape_cast %128 : vector<8x1xi1> to vector<8x1xi1>
    %139 = vector.broadcast %138 : vector<8x1xi1> to vector<8x32xi1>
    %140 = arith.select %139, %122, %78 : vector<8x32xi1>, vector<8x32xf32>
    %c1 = arith.constant 1 : index
    %c0_29 = arith.constant 0 : index
    %c0_30 = arith.constant 0 : index
    %141 = vector.load %arg15[%c1, %c0_29, %c0_30] : memref<8x8x32xf32, #tpu.memory_space<vmem>>, vector<1x8x32xf32>
    %142 = vector.shape_cast %141 : vector<1x8x32xf32> to vector<8x32xf32>
    %143 = vector.shape_cast %131 : vector<8x32xf32> to vector<1x8x32xf32>
    tpu.vector_store %arg15[%c1, %c0_29, %c0_30], %143 {strides = array<i32>} : memref<8x8x32xf32, #tpu.memory_space<vmem>>, vector<1x8x32xf32>,
    %c6 = arith.constant 6 : index
    %c0_31 = arith.constant 0 : index
    %c0_32 = arith.constant 0 : index
    %144 = vector.load %arg16[%c6, %c0_31, %c0_32] : memref<8x8x32xf32, #tpu.memory_space<vmem>>, vector<1x8x32xf32>
    %145 = vector.shape_cast %144 : vector<1x8x32xf32> to vector<8x32xf32>
    %146 = vector.shape_cast %137 : vector<8x32xf32> to vector<1x8x32xf32>
    tpu.vector_store %arg16[%c6, %c0_31, %c0_32], %146 {strides = array<i32>} : memref<8x8x32xf32, #tpu.memory_space<vmem>>, vector<1x8x32xf32>,
    %147 = vector.extract_strided_slice %15 {offsets = [2, 0, 0], sizes = [1, 8, 128], strides = [1, 1, 1]} : vector<8x8x128xf32> to vector<1x8x128xf32>
    %148 = vector.shape_cast %147 : vector<1x8x128xf32> to vector<8x128xf32>
    %149 = arith.truncf %131 : vector<8x32xf32> to vector<8x32xbf16>
    %cst_33 = arith.constant dense<0.000000e+00> : vector<8x128xf32>
    %150 = tpu.matmul %149, %17, %cst_33 {dimension_numbers = #tpu.dot_dimension_numbers<[1], [0], [0], [1], [0, 0, 1, 1], [], []>} : vector<8x32xbf16>, vector<32x128xbf16>, vector<8x128xf32> -> vector<8x128xf32>
    %151 = arith.addf %148, %150 : vector<8x128xf32>
    %152 = arith.negf %151 : vector<8x128xf32>
    %153 = math.exp %152 : vector<8x128xf32>
    %cst_34 = arith.constant 1.000000e+00 : f32
    %154 = vector.broadcast %cst_34 : f32 to vector<8x128xf32>
    %155 = arith.addf %154, %153 : vector<8x128xf32>
    %156 = arith.divf %154, %155 : vector<8x128xf32>
    %157 = math.tanh %151 : vector<8x128xf32>
    %158 = vector.extract_strided_slice %156 {offsets = [0, 0], sizes = [8, 32], strides = [1, 1]} : vector<8x128xf32> to vector<8x32xf32>
    %159 = vector.extract_strided_slice %156 {offsets = [0, 32], sizes = [8, 32], strides = [1, 1]} : vector<8x128xf32> to vector<8x32xf32>
    %160 = vector.extract_strided_slice %156 {offsets = [0, 96], sizes = [8, 32], strides = [1, 1]} : vector<8x128xf32> to vector<8x32xf32>
    %161 = vector.extract_strided_slice %157 {offsets = [0, 64], sizes = [8, 32], strides = [1, 1]} : vector<8x128xf32> to vector<8x32xf32>
    %162 = arith.mulf %159, %134 : vector<8x32xf32>
    %163 = arith.mulf %158, %161 : vector<8x32xf32>
    %164 = arith.addf %162, %163 : vector<8x32xf32>
    %165 = math.tanh %164 : vector<8x32xf32>
    %166 = arith.mulf %160, %165 : vector<8x32xf32>
    %167 = vector.extract_strided_slice %16 {offsets = [5, 0, 0], sizes = [1, 8, 128], strides = [1, 1, 1]} : vector<8x8x128xf32> to vector<1x8x128xf32>
    %168 = vector.shape_cast %167 : vector<1x8x128xf32> to vector<8x128xf32>
    %169 = arith.truncf %137 : vector<8x32xf32> to vector<8x32xbf16>
    %cst_35 = arith.constant dense<0.000000e+00> : vector<8x128xf32>
    %170 = tpu.matmul %169, %18, %cst_35 {dimension_numbers = #tpu.dot_dimension_numbers<[1], [0], [0], [1], [0, 0, 1, 1], [], []>} : vector<8x32xbf16>, vector<32x128xbf16>, vector<8x128xf32> -> vector<8x128xf32>
    %171 = arith.addf %168, %170 : vector<8x128xf32>
    %172 = arith.negf %171 : vector<8x128xf32>
    %173 = math.exp %172 : vector<8x128xf32>
    %cst_36 = arith.constant 1.000000e+00 : f32
    %174 = vector.broadcast %cst_36 : f32 to vector<8x128xf32>
    %175 = arith.addf %174, %173 : vector<8x128xf32>
    %176 = arith.divf %174, %175 : vector<8x128xf32>
    %177 = math.tanh %171 : vector<8x128xf32>
    %178 = vector.extract_strided_slice %176 {offsets = [0, 0], sizes = [8, 32], strides = [1, 1]} : vector<8x128xf32> to vector<8x32xf32>
    %179 = vector.extract_strided_slice %176 {offsets = [0, 32], sizes = [8, 32], strides = [1, 1]} : vector<8x128xf32> to vector<8x32xf32>
    %180 = vector.extract_strided_slice %176 {offsets = [0, 96], sizes = [8, 32], strides = [1, 1]} : vector<8x128xf32> to vector<8x32xf32>
    %181 = vector.extract_strided_slice %177 {offsets = [0, 64], sizes = [8, 32], strides = [1, 1]} : vector<8x128xf32> to vector<8x32xf32>
    %182 = arith.mulf %179, %140 : vector<8x32xf32>
    %183 = arith.mulf %178, %181 : vector<8x32xf32>
    %184 = arith.addf %182, %183 : vector<8x32xf32>
    %185 = math.tanh %184 : vector<8x32xf32>
    %186 = arith.mulf %180, %185 : vector<8x32xf32>
    %187 = vector.extract_strided_slice %4 {offsets = [2, 0, 0], sizes = [1, 8, 1], strides = [1, 1, 1]} : vector<8x8x1xi1> to vector<1x8x1xi1>
    %188 = vector.shape_cast %187 : vector<1x8x1xi1> to vector<8x1xi1>
    %189 = vector.extract_strided_slice %4 {offsets = [5, 0, 0], sizes = [1, 8, 1], strides = [1, 1, 1]} : vector<8x8x1xi1> to vector<1x8x1xi1>
    %190 = vector.shape_cast %189 : vector<1x8x1xi1> to vector<8x1xi1>
    %191 = vector.shape_cast %188 : vector<8x1xi1> to vector<8x1xi1>
    %192 = vector.broadcast %191 : vector<8x1xi1> to vector<8x32xi1>
    %193 = arith.select %192, %166, %131 : vector<8x32xi1>, vector<8x32xf32>
    %194 = vector.shape_cast %188 : vector<8x1xi1> to vector<8x1xi1>
    %195 = vector.broadcast %194 : vector<8x1xi1> to vector<8x32xi1>
    %196 = arith.select %195, %164, %134 : vector<8x32xi1>, vector<8x32xf32>
    %197 = vector.shape_cast %190 : vector<8x1xi1> to vector<8x1xi1>
    %198 = vector.broadcast %197 : vector<8x1xi1> to vector<8x32xi1>
    %199 = arith.select %198, %186, %137 : vector<8x32xi1>, vector<8x32xf32>
    %200 = vector.shape_cast %190 : vector<8x1xi1> to vector<8x1xi1>
    %201 = vector.broadcast %200 : vector<8x1xi1> to vector<8x32xi1>
    %202 = arith.select %201, %184, %140 : vector<8x32xi1>, vector<8x32xf32>
    %c2 = arith.constant 2 : index
    %c0_37 = arith.constant 0 : index
    %c0_38 = arith.constant 0 : index
    %203 = vector.load %arg15[%c2, %c0_37, %c0_38] : memref<8x8x32xf32, #tpu.memory_space<vmem>>, vector<1x8x32xf32>
    %204 = vector.shape_cast %203 : vector<1x8x32xf32> to vector<8x32xf32>
    %205 = vector.shape_cast %193 : vector<8x32xf32> to vector<1x8x32xf32>
    tpu.vector_store %arg15[%c2, %c0_37, %c0_38], %205 {strides = array<i32>} : memref<8x8x32xf32, #tpu.memory_space<vmem>>, vector<1x8x32xf32>,
    %c5 = arith.constant 5 : index
    %c0_39 = arith.constant 0 : index
    %c0_40 = arith.constant 0 : index
    %206 = vector.load %arg16[%c5, %c0_39, %c0_40] : memref<8x8x32xf32, #tpu.memory_space<vmem>>, vector<1x8x32xf32>
    %207 = vector.shape_cast %206 : vector<1x8x32xf32> to vector<8x32xf32>
    %208 = vector.shape_cast %199 : vector<8x32xf32> to vector<1x8x32xf32>
    tpu.vector_store %arg16[%c5, %c0_39, %c0_40], %208 {strides = array<i32>} : memref<8x8x32xf32, #tpu.memory_space<vmem>>, vector<1x8x32xf32>,
    %209 = vector.extract_strided_slice %15 {offsets = [3, 0, 0], sizes = [1, 8, 128], strides = [1, 1, 1]} : vector<8x8x128xf32> to vector<1x8x128xf32>
    %210 = vector.shape_cast %209 : vector<1x8x128xf32> to vector<8x128xf32>
    %211 = arith.truncf %193 : vector<8x32xf32> to vector<8x32xbf16>
    %cst_41 = arith.constant dense<0.000000e+00> : vector<8x128xf32>
    %212 = tpu.matmul %211, %17, %cst_41 {dimension_numbers = #tpu.dot_dimension_numbers<[1], [0], [0], [1], [0, 0, 1, 1], [], []>} : vector<8x32xbf16>, vector<32x128xbf16>, vector<8x128xf32> -> vector<8x128xf32>
    %213 = arith.addf %210, %212 : vector<8x128xf32>
    %214 = arith.negf %213 : vector<8x128xf32>
    %215 = math.exp %214 : vector<8x128xf32>
    %cst_42 = arith.constant 1.000000e+00 : f32
    %216 = vector.broadcast %cst_42 : f32 to vector<8x128xf32>
    %217 = arith.addf %216, %215 : vector<8x128xf32>
    %218 = arith.divf %216, %217 : vector<8x128xf32>
    %219 = math.tanh %213 : vector<8x128xf32>
    %220 = vector.extract_strided_slice %218 {offsets = [0, 0], sizes = [8, 32], strides = [1, 1]} : vector<8x128xf32> to vector<8x32xf32>
    %221 = vector.extract_strided_slice %218 {offsets = [0, 32], sizes = [8, 32], strides = [1, 1]} : vector<8x128xf32> to vector<8x32xf32>
    %222 = vector.extract_strided_slice %218 {offsets = [0, 96], sizes = [8, 32], strides = [1, 1]} : vector<8x128xf32> to vector<8x32xf32>
    %223 = vector.extract_strided_slice %219 {offsets = [0, 64], sizes = [8, 32], strides = [1, 1]} : vector<8x128xf32> to vector<8x32xf32>
    %224 = arith.mulf %221, %196 : vector<8x32xf32>
    %225 = arith.mulf %220, %223 : vector<8x32xf32>
    %226 = arith.addf %224, %225 : vector<8x32xf32>
    %227 = math.tanh %226 : vector<8x32xf32>
    %228 = arith.mulf %222, %227 : vector<8x32xf32>
    %229 = vector.extract_strided_slice %16 {offsets = [4, 0, 0], sizes = [1, 8, 128], strides = [1, 1, 1]} : vector<8x8x128xf32> to vector<1x8x128xf32>
    %230 = vector.shape_cast %229 : vector<1x8x128xf32> to vector<8x128xf32>
    %231 = arith.truncf %199 : vector<8x32xf32> to vector<8x32xbf16>
    %cst_43 = arith.constant dense<0.000000e+00> : vector<8x128xf32>
    %232 = tpu.matmul %231, %18, %cst_43 {dimension_numbers = #tpu.dot_dimension_numbers<[1], [0], [0], [1], [0, 0, 1, 1], [], []>} : vector<8x32xbf16>, vector<32x128xbf16>, vector<8x128xf32> -> vector<8x128xf32>
    %233 = arith.addf %230, %232 : vector<8x128xf32>
    %234 = arith.negf %233 : vector<8x128xf32>
    %235 = math.exp %234 : vector<8x128xf32>
    %cst_44 = arith.constant 1.000000e+00 : f32
    %236 = vector.broadcast %cst_44 : f32 to vector<8x128xf32>
    %237 = arith.addf %236, %235 : vector<8x128xf32>
    %238 = arith.divf %236, %237 : vector<8x128xf32>
    %239 = math.tanh %233 : vector<8x128xf32>
    %240 = vector.extract_strided_slice %238 {offsets = [0, 0], sizes = [8, 32], strides = [1, 1]} : vector<8x128xf32> to vector<8x32xf32>
    %241 = vector.extract_strided_slice %238 {offsets = [0, 32], sizes = [8, 32], strides = [1, 1]} : vector<8x128xf32> to vector<8x32xf32>
    %242 = vector.extract_strided_slice %238 {offsets = [0, 96], sizes = [8, 32], strides = [1, 1]} : vector<8x128xf32> to vector<8x32xf32>
    %243 = vector.extract_strided_slice %239 {offsets = [0, 64], sizes = [8, 32], strides = [1, 1]} : vector<8x128xf32> to vector<8x32xf32>
    %244 = arith.mulf %241, %202 : vector<8x32xf32>
    %245 = arith.mulf %240, %243 : vector<8x32xf32>
    %246 = arith.addf %244, %245 : vector<8x32xf32>
    %247 = math.tanh %246 : vector<8x32xf32>
    %248 = arith.mulf %242, %247 : vector<8x32xf32>
    %249 = vector.extract_strided_slice %4 {offsets = [3, 0, 0], sizes = [1, 8, 1], strides = [1, 1, 1]} : vector<8x8x1xi1> to vector<1x8x1xi1>
    %250 = vector.shape_cast %249 : vector<1x8x1xi1> to vector<8x1xi1>
    %251 = vector.extract_strided_slice %4 {offsets = [4, 0, 0], sizes = [1, 8, 1], strides = [1, 1, 1]} : vector<8x8x1xi1> to vector<1x8x1xi1>
    %252 = vector.shape_cast %251 : vector<1x8x1xi1> to vector<8x1xi1>
    %253 = vector.shape_cast %250 : vector<8x1xi1> to vector<8x1xi1>
    %254 = vector.broadcast %253 : vector<8x1xi1> to vector<8x32xi1>
    %255 = arith.select %254, %228, %193 : vector<8x32xi1>, vector<8x32xf32>
    %256 = vector.shape_cast %250 : vector<8x1xi1> to vector<8x1xi1>
    %257 = vector.broadcast %256 : vector<8x1xi1> to vector<8x32xi1>
    %258 = arith.select %257, %226, %196 : vector<8x32xi1>, vector<8x32xf32>
    %259 = vector.shape_cast %252 : vector<8x1xi1> to vector<8x1xi1>
    %260 = vector.broadcast %259 : vector<8x1xi1> to vector<8x32xi1>
    %261 = arith.select %260, %248, %199 : vector<8x32xi1>, vector<8x32xf32>
    %262 = vector.shape_cast %252 : vector<8x1xi1> to vector<8x1xi1>
    %263 = vector.broadcast %262 : vector<8x1xi1> to vector<8x32xi1>
    %264 = arith.select %263, %246, %202 : vector<8x32xi1>, vector<8x32xf32>
    %c3 = arith.constant 3 : index
    %c0_45 = arith.constant 0 : index
    %c0_46 = arith.constant 0 : index
    %265 = vector.load %arg15[%c3, %c0_45, %c0_46] : memref<8x8x32xf32, #tpu.memory_space<vmem>>, vector<1x8x32xf32>
    %266 = vector.shape_cast %265 : vector<1x8x32xf32> to vector<8x32xf32>
    %267 = vector.shape_cast %255 : vector<8x32xf32> to vector<1x8x32xf32>
    tpu.vector_store %arg15[%c3, %c0_45, %c0_46], %267 {strides = array<i32>} : memref<8x8x32xf32, #tpu.memory_space<vmem>>, vector<1x8x32xf32>,
    %c4 = arith.constant 4 : index
    %c0_47 = arith.constant 0 : index
    %c0_48 = arith.constant 0 : index
    %268 = vector.load %arg16[%c4, %c0_47, %c0_48] : memref<8x8x32xf32, #tpu.memory_space<vmem>>, vector<1x8x32xf32>
    %269 = vector.shape_cast %268 : vector<1x8x32xf32> to vector<8x32xf32>
    %270 = vector.shape_cast %261 : vector<8x32xf32> to vector<1x8x32xf32>
    tpu.vector_store %arg16[%c4, %c0_47, %c0_48], %270 {strides = array<i32>} : memref<8x8x32xf32, #tpu.memory_space<vmem>>, vector<1x8x32xf32>,
    %271 = vector.extract_strided_slice %15 {offsets = [4, 0, 0], sizes = [1, 8, 128], strides = [1, 1, 1]} : vector<8x8x128xf32> to vector<1x8x128xf32>
    %272 = vector.shape_cast %271 : vector<1x8x128xf32> to vector<8x128xf32>
    %273 = arith.truncf %255 : vector<8x32xf32> to vector<8x32xbf16>
    %cst_49 = arith.constant dense<0.000000e+00> : vector<8x128xf32>
    %274 = tpu.matmul %273, %17, %cst_49 {dimension_numbers = #tpu.dot_dimension_numbers<[1], [0], [0], [1], [0, 0, 1, 1], [], []>} : vector<8x32xbf16>, vector<32x128xbf16>, vector<8x128xf32> -> vector<8x128xf32>
    %275 = arith.addf %272, %274 : vector<8x128xf32>
    %276 = arith.negf %275 : vector<8x128xf32>
    %277 = math.exp %276 : vector<8x128xf32>
    %cst_50 = arith.constant 1.000000e+00 : f32
    %278 = vector.broadcast %cst_50 : f32 to vector<8x128xf32>
    %279 = arith.addf %278, %277 : vector<8x128xf32>
    %280 = arith.divf %278, %279 : vector<8x128xf32>
    %281 = math.tanh %275 : vector<8x128xf32>
    %282 = vector.extract_strided_slice %280 {offsets = [0, 0], sizes = [8, 32], strides = [1, 1]} : vector<8x128xf32> to vector<8x32xf32>
    %283 = vector.extract_strided_slice %280 {offsets = [0, 32], sizes = [8, 32], strides = [1, 1]} : vector<8x128xf32> to vector<8x32xf32>
    %284 = vector.extract_strided_slice %280 {offsets = [0, 96], sizes = [8, 32], strides = [1, 1]} : vector<8x128xf32> to vector<8x32xf32>
    %285 = vector.extract_strided_slice %281 {offsets = [0, 64], sizes = [8, 32], strides = [1, 1]} : vector<8x128xf32> to vector<8x32xf32>
    %286 = arith.mulf %283, %258 : vector<8x32xf32>
    %287 = arith.mulf %282, %285 : vector<8x32xf32>
    %288 = arith.addf %286, %287 : vector<8x32xf32>
    %289 = math.tanh %288 : vector<8x32xf32>
    %290 = arith.mulf %284, %289 : vector<8x32xf32>
    %291 = vector.extract_strided_slice %16 {offsets = [3, 0, 0], sizes = [1, 8, 128], strides = [1, 1, 1]} : vector<8x8x128xf32> to vector<1x8x128xf32>
    %292 = vector.shape_cast %291 : vector<1x8x128xf32> to vector<8x128xf32>
    %293 = arith.truncf %261 : vector<8x32xf32> to vector<8x32xbf16>
    %cst_51 = arith.constant dense<0.000000e+00> : vector<8x128xf32>
    %294 = tpu.matmul %293, %18, %cst_51 {dimension_numbers = #tpu.dot_dimension_numbers<[1], [0], [0], [1], [0, 0, 1, 1], [], []>} : vector<8x32xbf16>, vector<32x128xbf16>, vector<8x128xf32> -> vector<8x128xf32>
    %295 = arith.addf %292, %294 : vector<8x128xf32>
    %296 = arith.negf %295 : vector<8x128xf32>
    %297 = math.exp %296 : vector<8x128xf32>
    %cst_52 = arith.constant 1.000000e+00 : f32
    %298 = vector.broadcast %cst_52 : f32 to vector<8x128xf32>
    %299 = arith.addf %298, %297 : vector<8x128xf32>
    %300 = arith.divf %298, %299 : vector<8x128xf32>
    %301 = math.tanh %295 : vector<8x128xf32>
    %302 = vector.extract_strided_slice %300 {offsets = [0, 0], sizes = [8, 32], strides = [1, 1]} : vector<8x128xf32> to vector<8x32xf32>
    %303 = vector.extract_strided_slice %300 {offsets = [0, 32], sizes = [8, 32], strides = [1, 1]} : vector<8x128xf32> to vector<8x32xf32>
    %304 = vector.extract_strided_slice %300 {offsets = [0, 96], sizes = [8, 32], strides = [1, 1]} : vector<8x128xf32> to vector<8x32xf32>
    %305 = vector.extract_strided_slice %301 {offsets = [0, 64], sizes = [8, 32], strides = [1, 1]} : vector<8x128xf32> to vector<8x32xf32>
    %306 = arith.mulf %303, %264 : vector<8x32xf32>
    %307 = arith.mulf %302, %305 : vector<8x32xf32>
    %308 = arith.addf %306, %307 : vector<8x32xf32>
    %309 = math.tanh %308 : vector<8x32xf32>
    %310 = arith.mulf %304, %309 : vector<8x32xf32>
    %311 = vector.extract_strided_slice %4 {offsets = [4, 0, 0], sizes = [1, 8, 1], strides = [1, 1, 1]} : vector<8x8x1xi1> to vector<1x8x1xi1>
    %312 = vector.shape_cast %311 : vector<1x8x1xi1> to vector<8x1xi1>
    %313 = vector.extract_strided_slice %4 {offsets = [3, 0, 0], sizes = [1, 8, 1], strides = [1, 1, 1]} : vector<8x8x1xi1> to vector<1x8x1xi1>
    %314 = vector.shape_cast %313 : vector<1x8x1xi1> to vector<8x1xi1>
    %315 = vector.shape_cast %312 : vector<8x1xi1> to vector<8x1xi1>
    %316 = vector.broadcast %315 : vector<8x1xi1> to vector<8x32xi1>
    %317 = arith.select %316, %290, %255 : vector<8x32xi1>, vector<8x32xf32>
    %318 = vector.shape_cast %312 : vector<8x1xi1> to vector<8x1xi1>
    %319 = vector.broadcast %318 : vector<8x1xi1> to vector<8x32xi1>
    %320 = arith.select %319, %288, %258 : vector<8x32xi1>, vector<8x32xf32>
    %321 = vector.shape_cast %314 : vector<8x1xi1> to vector<8x1xi1>
    %322 = vector.broadcast %321 : vector<8x1xi1> to vector<8x32xi1>
    %323 = arith.select %322, %310, %261 : vector<8x32xi1>, vector<8x32xf32>
    %324 = vector.shape_cast %314 : vector<8x1xi1> to vector<8x1xi1>
    %325 = vector.broadcast %324 : vector<8x1xi1> to vector<8x32xi1>
    %326 = arith.select %325, %308, %264 : vector<8x32xi1>, vector<8x32xf32>
    %c4_53 = arith.constant 4 : index
    %c0_54 = arith.constant 0 : index
    %c0_55 = arith.constant 0 : index
    %327 = vector.load %arg15[%c4_53, %c0_54, %c0_55] : memref<8x8x32xf32, #tpu.memory_space<vmem>>, vector<1x8x32xf32>
    %328 = vector.shape_cast %327 : vector<1x8x32xf32> to vector<8x32xf32>
    %329 = vector.shape_cast %317 : vector<8x32xf32> to vector<1x8x32xf32>
    tpu.vector_store %arg15[%c4_53, %c0_54, %c0_55], %329 {strides = array<i32>} : memref<8x8x32xf32, #tpu.memory_space<vmem>>, vector<1x8x32xf32>,
    %c3_56 = arith.constant 3 : index
    %c0_57 = arith.constant 0 : index
    %c0_58 = arith.constant 0 : index
    %330 = vector.load %arg16[%c3_56, %c0_57, %c0_58] : memref<8x8x32xf32, #tpu.memory_space<vmem>>, vector<1x8x32xf32>
    %331 = vector.shape_cast %330 : vector<1x8x32xf32> to vector<8x32xf32>
    %332 = vector.shape_cast %323 : vector<8x32xf32> to vector<1x8x32xf32>
    tpu.vector_store %arg16[%c3_56, %c0_57, %c0_58], %332 {strides = array<i32>} : memref<8x8x32xf32, #tpu.memory_space<vmem>>, vector<1x8x32xf32>,
    %333 = vector.extract_strided_slice %15 {offsets = [5, 0, 0], sizes = [1, 8, 128], strides = [1, 1, 1]} : vector<8x8x128xf32> to vector<1x8x128xf32>
    %334 = vector.shape_cast %333 : vector<1x8x128xf32> to vector<8x128xf32>
    %335 = arith.truncf %317 : vector<8x32xf32> to vector<8x32xbf16>
    %cst_59 = arith.constant dense<0.000000e+00> : vector<8x128xf32>
    %336 = tpu.matmul %335, %17, %cst_59 {dimension_numbers = #tpu.dot_dimension_numbers<[1], [0], [0], [1], [0, 0, 1, 1], [], []>} : vector<8x32xbf16>, vector<32x128xbf16>, vector<8x128xf32> -> vector<8x128xf32>
    %337 = arith.addf %334, %336 : vector<8x128xf32>
    %338 = arith.negf %337 : vector<8x128xf32>
    %339 = math.exp %338 : vector<8x128xf32>
    %cst_60 = arith.constant 1.000000e+00 : f32
    %340 = vector.broadcast %cst_60 : f32 to vector<8x128xf32>
    %341 = arith.addf %340, %339 : vector<8x128xf32>
    %342 = arith.divf %340, %341 : vector<8x128xf32>
    %343 = math.tanh %337 : vector<8x128xf32>
    %344 = vector.extract_strided_slice %342 {offsets = [0, 0], sizes = [8, 32], strides = [1, 1]} : vector<8x128xf32> to vector<8x32xf32>
    %345 = vector.extract_strided_slice %342 {offsets = [0, 32], sizes = [8, 32], strides = [1, 1]} : vector<8x128xf32> to vector<8x32xf32>
    %346 = vector.extract_strided_slice %342 {offsets = [0, 96], sizes = [8, 32], strides = [1, 1]} : vector<8x128xf32> to vector<8x32xf32>
    %347 = vector.extract_strided_slice %343 {offsets = [0, 64], sizes = [8, 32], strides = [1, 1]} : vector<8x128xf32> to vector<8x32xf32>
    %348 = arith.mulf %345, %320 : vector<8x32xf32>
    %349 = arith.mulf %344, %347 : vector<8x32xf32>
    %350 = arith.addf %348, %349 : vector<8x32xf32>
    %351 = math.tanh %350 : vector<8x32xf32>
    %352 = arith.mulf %346, %351 : vector<8x32xf32>
    %353 = vector.extract_strided_slice %16 {offsets = [2, 0, 0], sizes = [1, 8, 128], strides = [1, 1, 1]} : vector<8x8x128xf32> to vector<1x8x128xf32>
    %354 = vector.shape_cast %353 : vector<1x8x128xf32> to vector<8x128xf32>
    %355 = arith.truncf %323 : vector<8x32xf32> to vector<8x32xbf16>
    %cst_61 = arith.constant dense<0.000000e+00> : vector<8x128xf32>
    %356 = tpu.matmul %355, %18, %cst_61 {dimension_numbers = #tpu.dot_dimension_numbers<[1], [0], [0], [1], [0, 0, 1, 1], [], []>} : vector<8x32xbf16>, vector<32x128xbf16>, vector<8x128xf32> -> vector<8x128xf32>
    %357 = arith.addf %354, %356 : vector<8x128xf32>
    %358 = arith.negf %357 : vector<8x128xf32>
    %359 = math.exp %358 : vector<8x128xf32>
    %cst_62 = arith.constant 1.000000e+00 : f32
    %360 = vector.broadcast %cst_62 : f32 to vector<8x128xf32>
    %361 = arith.addf %360, %359 : vector<8x128xf32>
    %362 = arith.divf %360, %361 : vector<8x128xf32>
    %363 = math.tanh %357 : vector<8x128xf32>
    %364 = vector.extract_strided_slice %362 {offsets = [0, 0], sizes = [8, 32], strides = [1, 1]} : vector<8x128xf32> to vector<8x32xf32>
    %365 = vector.extract_strided_slice %362 {offsets = [0, 32], sizes = [8, 32], strides = [1, 1]} : vector<8x128xf32> to vector<8x32xf32>
    %366 = vector.extract_strided_slice %362 {offsets = [0, 96], sizes = [8, 32], strides = [1, 1]} : vector<8x128xf32> to vector<8x32xf32>
    %367 = vector.extract_strided_slice %363 {offsets = [0, 64], sizes = [8, 32], strides = [1, 1]} : vector<8x128xf32> to vector<8x32xf32>
    %368 = arith.mulf %365, %326 : vector<8x32xf32>
    %369 = arith.mulf %364, %367 : vector<8x32xf32>
    %370 = arith.addf %368, %369 : vector<8x32xf32>
    %371 = math.tanh %370 : vector<8x32xf32>
    %372 = arith.mulf %366, %371 : vector<8x32xf32>
    %373 = vector.extract_strided_slice %4 {offsets = [5, 0, 0], sizes = [1, 8, 1], strides = [1, 1, 1]} : vector<8x8x1xi1> to vector<1x8x1xi1>
    %374 = vector.shape_cast %373 : vector<1x8x1xi1> to vector<8x1xi1>
    %375 = vector.extract_strided_slice %4 {offsets = [2, 0, 0], sizes = [1, 8, 1], strides = [1, 1, 1]} : vector<8x8x1xi1> to vector<1x8x1xi1>
    %376 = vector.shape_cast %375 : vector<1x8x1xi1> to vector<8x1xi1>
    %377 = vector.shape_cast %374 : vector<8x1xi1> to vector<8x1xi1>
    %378 = vector.broadcast %377 : vector<8x1xi1> to vector<8x32xi1>
    %379 = arith.select %378, %352, %317 : vector<8x32xi1>, vector<8x32xf32>
    %380 = vector.shape_cast %374 : vector<8x1xi1> to vector<8x1xi1>
    %381 = vector.broadcast %380 : vector<8x1xi1> to vector<8x32xi1>
    %382 = arith.select %381, %350, %320 : vector<8x32xi1>, vector<8x32xf32>
    %383 = vector.shape_cast %376 : vector<8x1xi1> to vector<8x1xi1>
    %384 = vector.broadcast %383 : vector<8x1xi1> to vector<8x32xi1>
    %385 = arith.select %384, %372, %323 : vector<8x32xi1>, vector<8x32xf32>
    %386 = vector.shape_cast %376 : vector<8x1xi1> to vector<8x1xi1>
    %387 = vector.broadcast %386 : vector<8x1xi1> to vector<8x32xi1>
    %388 = arith.select %387, %370, %326 : vector<8x32xi1>, vector<8x32xf32>
    %c5_63 = arith.constant 5 : index
    %c0_64 = arith.constant 0 : index
    %c0_65 = arith.constant 0 : index
    %389 = vector.load %arg15[%c5_63, %c0_64, %c0_65] : memref<8x8x32xf32, #tpu.memory_space<vmem>>, vector<1x8x32xf32>
    %390 = vector.shape_cast %389 : vector<1x8x32xf32> to vector<8x32xf32>
    %391 = vector.shape_cast %379 : vector<8x32xf32> to vector<1x8x32xf32>
    tpu.vector_store %arg15[%c5_63, %c0_64, %c0_65], %391 {strides = array<i32>} : memref<8x8x32xf32, #tpu.memory_space<vmem>>, vector<1x8x32xf32>,
    %c2_66 = arith.constant 2 : index
    %c0_67 = arith.constant 0 : index
    %c0_68 = arith.constant 0 : index
    %392 = vector.load %arg16[%c2_66, %c0_67, %c0_68] : memref<8x8x32xf32, #tpu.memory_space<vmem>>, vector<1x8x32xf32>
    %393 = vector.shape_cast %392 : vector<1x8x32xf32> to vector<8x32xf32>
    %394 = vector.shape_cast %385 : vector<8x32xf32> to vector<1x8x32xf32>
    tpu.vector_store %arg16[%c2_66, %c0_67, %c0_68], %394 {strides = array<i32>} : memref<8x8x32xf32, #tpu.memory_space<vmem>>, vector<1x8x32xf32>,
    %395 = vector.extract_strided_slice %15 {offsets = [6, 0, 0], sizes = [1, 8, 128], strides = [1, 1, 1]} : vector<8x8x128xf32> to vector<1x8x128xf32>
    %396 = vector.shape_cast %395 : vector<1x8x128xf32> to vector<8x128xf32>
    %397 = arith.truncf %379 : vector<8x32xf32> to vector<8x32xbf16>
    %cst_69 = arith.constant dense<0.000000e+00> : vector<8x128xf32>
    %398 = tpu.matmul %397, %17, %cst_69 {dimension_numbers = #tpu.dot_dimension_numbers<[1], [0], [0], [1], [0, 0, 1, 1], [], []>} : vector<8x32xbf16>, vector<32x128xbf16>, vector<8x128xf32> -> vector<8x128xf32>
    %399 = arith.addf %396, %398 : vector<8x128xf32>
    %400 = arith.negf %399 : vector<8x128xf32>
    %401 = math.exp %400 : vector<8x128xf32>
    %cst_70 = arith.constant 1.000000e+00 : f32
    %402 = vector.broadcast %cst_70 : f32 to vector<8x128xf32>
    %403 = arith.addf %402, %401 : vector<8x128xf32>
    %404 = arith.divf %402, %403 : vector<8x128xf32>
    %405 = math.tanh %399 : vector<8x128xf32>
    %406 = vector.extract_strided_slice %404 {offsets = [0, 0], sizes = [8, 32], strides = [1, 1]} : vector<8x128xf32> to vector<8x32xf32>
    %407 = vector.extract_strided_slice %404 {offsets = [0, 32], sizes = [8, 32], strides = [1, 1]} : vector<8x128xf32> to vector<8x32xf32>
    %408 = vector.extract_strided_slice %404 {offsets = [0, 96], sizes = [8, 32], strides = [1, 1]} : vector<8x128xf32> to vector<8x32xf32>
    %409 = vector.extract_strided_slice %405 {offsets = [0, 64], sizes = [8, 32], strides = [1, 1]} : vector<8x128xf32> to vector<8x32xf32>
    %410 = arith.mulf %407, %382 : vector<8x32xf32>
    %411 = arith.mulf %406, %409 : vector<8x32xf32>
    %412 = arith.addf %410, %411 : vector<8x32xf32>
    %413 = math.tanh %412 : vector<8x32xf32>
    %414 = arith.mulf %408, %413 : vector<8x32xf32>
    %415 = vector.extract_strided_slice %16 {offsets = [1, 0, 0], sizes = [1, 8, 128], strides = [1, 1, 1]} : vector<8x8x128xf32> to vector<1x8x128xf32>
    %416 = vector.shape_cast %415 : vector<1x8x128xf32> to vector<8x128xf32>
    %417 = arith.truncf %385 : vector<8x32xf32> to vector<8x32xbf16>
    %cst_71 = arith.constant dense<0.000000e+00> : vector<8x128xf32>
    %418 = tpu.matmul %417, %18, %cst_71 {dimension_numbers = #tpu.dot_dimension_numbers<[1], [0], [0], [1], [0, 0, 1, 1], [], []>} : vector<8x32xbf16>, vector<32x128xbf16>, vector<8x128xf32> -> vector<8x128xf32>
    %419 = arith.addf %416, %418 : vector<8x128xf32>
    %420 = arith.negf %419 : vector<8x128xf32>
    %421 = math.exp %420 : vector<8x128xf32>
    %cst_72 = arith.constant 1.000000e+00 : f32
    %422 = vector.broadcast %cst_72 : f32 to vector<8x128xf32>
    %423 = arith.addf %422, %421 : vector<8x128xf32>
    %424 = arith.divf %422, %423 : vector<8x128xf32>
    %425 = math.tanh %419 : vector<8x128xf32>
    %426 = vector.extract_strided_slice %424 {offsets = [0, 0], sizes = [8, 32], strides = [1, 1]} : vector<8x128xf32> to vector<8x32xf32>
    %427 = vector.extract_strided_slice %424 {offsets = [0, 32], sizes = [8, 32], strides = [1, 1]} : vector<8x128xf32> to vector<8x32xf32>
    %428 = vector.extract_strided_slice %424 {offsets = [0, 96], sizes = [8, 32], strides = [1, 1]} : vector<8x128xf32> to vector<8x32xf32>
    %429 = vector.extract_strided_slice %425 {offsets = [0, 64], sizes = [8, 32], strides = [1, 1]} : vector<8x128xf32> to vector<8x32xf32>
    %430 = arith.mulf %427, %388 : vector<8x32xf32>
    %431 = arith.mulf %426, %429 : vector<8x32xf32>
    %432 = arith.addf %430, %431 : vector<8x32xf32>
    %433 = math.tanh %432 : vector<8x32xf32>
    %434 = arith.mulf %428, %433 : vector<8x32xf32>
    %435 = vector.extract_strided_slice %4 {offsets = [6, 0, 0], sizes = [1, 8, 1], strides = [1, 1, 1]} : vector<8x8x1xi1> to vector<1x8x1xi1>
    %436 = vector.shape_cast %435 : vector<1x8x1xi1> to vector<8x1xi1>
    %437 = vector.extract_strided_slice %4 {offsets = [1, 0, 0], sizes = [1, 8, 1], strides = [1, 1, 1]} : vector<8x8x1xi1> to vector<1x8x1xi1>
    %438 = vector.shape_cast %437 : vector<1x8x1xi1> to vector<8x1xi1>
    %439 = vector.shape_cast %436 : vector<8x1xi1> to vector<8x1xi1>
    %440 = vector.broadcast %439 : vector<8x1xi1> to vector<8x32xi1>
    %441 = arith.select %440, %414, %379 : vector<8x32xi1>, vector<8x32xf32>
    %442 = vector.shape_cast %436 : vector<8x1xi1> to vector<8x1xi1>
    %443 = vector.broadcast %442 : vector<8x1xi1> to vector<8x32xi1>
    %444 = arith.select %443, %412, %382 : vector<8x32xi1>, vector<8x32xf32>
    %445 = vector.shape_cast %438 : vector<8x1xi1> to vector<8x1xi1>
    %446 = vector.broadcast %445 : vector<8x1xi1> to vector<8x32xi1>
    %447 = arith.select %446, %434, %385 : vector<8x32xi1>, vector<8x32xf32>
    %448 = vector.shape_cast %438 : vector<8x1xi1> to vector<8x1xi1>
    %449 = vector.broadcast %448 : vector<8x1xi1> to vector<8x32xi1>
    %450 = arith.select %449, %432, %388 : vector<8x32xi1>, vector<8x32xf32>
    %c6_73 = arith.constant 6 : index
    %c0_74 = arith.constant 0 : index
    %c0_75 = arith.constant 0 : index
    %451 = vector.load %arg15[%c6_73, %c0_74, %c0_75] : memref<8x8x32xf32, #tpu.memory_space<vmem>>, vector<1x8x32xf32>
    %452 = vector.shape_cast %451 : vector<1x8x32xf32> to vector<8x32xf32>
    %453 = vector.shape_cast %441 : vector<8x32xf32> to vector<1x8x32xf32>
    tpu.vector_store %arg15[%c6_73, %c0_74, %c0_75], %453 {strides = array<i32>} : memref<8x8x32xf32, #tpu.memory_space<vmem>>, vector<1x8x32xf32>,
    %c1_76 = arith.constant 1 : index
    %c0_77 = arith.constant 0 : index
    %c0_78 = arith.constant 0 : index
    %454 = vector.load %arg16[%c1_76, %c0_77, %c0_78] : memref<8x8x32xf32, #tpu.memory_space<vmem>>, vector<1x8x32xf32>
    %455 = vector.shape_cast %454 : vector<1x8x32xf32> to vector<8x32xf32>
    %456 = vector.shape_cast %447 : vector<8x32xf32> to vector<1x8x32xf32>
    tpu.vector_store %arg16[%c1_76, %c0_77, %c0_78], %456 {strides = array<i32>} : memref<8x8x32xf32, #tpu.memory_space<vmem>>, vector<1x8x32xf32>,
    %457 = vector.extract_strided_slice %15 {offsets = [7, 0, 0], sizes = [1, 8, 128], strides = [1, 1, 1]} : vector<8x8x128xf32> to vector<1x8x128xf32>
    %458 = vector.shape_cast %457 : vector<1x8x128xf32> to vector<8x128xf32>
    %459 = arith.truncf %441 : vector<8x32xf32> to vector<8x32xbf16>
    %cst_79 = arith.constant dense<0.000000e+00> : vector<8x128xf32>
    %460 = tpu.matmul %459, %17, %cst_79 {dimension_numbers = #tpu.dot_dimension_numbers<[1], [0], [0], [1], [0, 0, 1, 1], [], []>} : vector<8x32xbf16>, vector<32x128xbf16>, vector<8x128xf32> -> vector<8x128xf32>
    %461 = arith.addf %458, %460 : vector<8x128xf32>
    %462 = arith.negf %461 : vector<8x128xf32>
    %463 = math.exp %462 : vector<8x128xf32>
    %cst_80 = arith.constant 1.000000e+00 : f32
    %464 = vector.broadcast %cst_80 : f32 to vector<8x128xf32>
    %465 = arith.addf %464, %463 : vector<8x128xf32>
    %466 = arith.divf %464, %465 : vector<8x128xf32>
    %467 = math.tanh %461 : vector<8x128xf32>
    %468 = vector.extract_strided_slice %466 {offsets = [0, 0], sizes = [8, 32], strides = [1, 1]} : vector<8x128xf32> to vector<8x32xf32>
    %469 = vector.extract_strided_slice %466 {offsets = [0, 32], sizes = [8, 32], strides = [1, 1]} : vector<8x128xf32> to vector<8x32xf32>
    %470 = vector.extract_strided_slice %466 {offsets = [0, 96], sizes = [8, 32], strides = [1, 1]} : vector<8x128xf32> to vector<8x32xf32>
    %471 = vector.extract_strided_slice %467 {offsets = [0, 64], sizes = [8, 32], strides = [1, 1]} : vector<8x128xf32> to vector<8x32xf32>
    %472 = arith.mulf %469, %444 : vector<8x32xf32>
    %473 = arith.mulf %468, %471 : vector<8x32xf32>
    %474 = arith.addf %472, %473 : vector<8x32xf32>
    %475 = math.tanh %474 : vector<8x32xf32>
    %476 = arith.mulf %470, %475 : vector<8x32xf32>
    %477 = vector.extract_strided_slice %16 {offsets = [0, 0, 0], sizes = [1, 8, 128], strides = [1, 1, 1]} : vector<8x8x128xf32> to vector<1x8x128xf32>
    %478 = vector.shape_cast %477 : vector<1x8x128xf32> to vector<8x128xf32>
    %479 = arith.truncf %447 : vector<8x32xf32> to vector<8x32xbf16>
    %cst_81 = arith.constant dense<0.000000e+00> : vector<8x128xf32>
    %480 = tpu.matmul %479, %18, %cst_81 {dimension_numbers = #tpu.dot_dimension_numbers<[1], [0], [0], [1], [0, 0, 1, 1], [], []>} : vector<8x32xbf16>, vector<32x128xbf16>, vector<8x128xf32> -> vector<8x128xf32>
    %481 = arith.addf %478, %480 : vector<8x128xf32>
    %482 = arith.negf %481 : vector<8x128xf32>
    %483 = math.exp %482 : vector<8x128xf32>
    %cst_82 = arith.constant 1.000000e+00 : f32
    %484 = vector.broadcast %cst_82 : f32 to vector<8x128xf32>
    %485 = arith.addf %484, %483 : vector<8x128xf32>
    %486 = arith.divf %484, %485 : vector<8x128xf32>
    %487 = math.tanh %481 : vector<8x128xf32>
    %488 = vector.extract_strided_slice %486 {offsets = [0, 0], sizes = [8, 32], strides = [1, 1]} : vector<8x128xf32> to vector<8x32xf32>
    %489 = vector.extract_strided_slice %486 {offsets = [0, 32], sizes = [8, 32], strides = [1, 1]} : vector<8x128xf32> to vector<8x32xf32>
    %490 = vector.extract_strided_slice %486 {offsets = [0, 96], sizes = [8, 32], strides = [1, 1]} : vector<8x128xf32> to vector<8x32xf32>
    %491 = vector.extract_strided_slice %487 {offsets = [0, 64], sizes = [8, 32], strides = [1, 1]} : vector<8x128xf32> to vector<8x32xf32>
    %492 = arith.mulf %489, %450 : vector<8x32xf32>
    %493 = arith.mulf %488, %491 : vector<8x32xf32>
    %494 = arith.addf %492, %493 : vector<8x32xf32>
    %495 = math.tanh %494 : vector<8x32xf32>
    %496 = arith.mulf %490, %495 : vector<8x32xf32>
    %497 = vector.extract_strided_slice %4 {offsets = [7, 0, 0], sizes = [1, 8, 1], strides = [1, 1, 1]} : vector<8x8x1xi1> to vector<1x8x1xi1>
    %498 = vector.shape_cast %497 : vector<1x8x1xi1> to vector<8x1xi1>
    %499 = vector.extract_strided_slice %4 {offsets = [0, 0, 0], sizes = [1, 8, 1], strides = [1, 1, 1]} : vector<8x8x1xi1> to vector<1x8x1xi1>
    %500 = vector.shape_cast %499 : vector<1x8x1xi1> to vector<8x1xi1>
    %501 = vector.shape_cast %498 : vector<8x1xi1> to vector<8x1xi1>
    %502 = vector.broadcast %501 : vector<8x1xi1> to vector<8x32xi1>
    %503 = arith.select %502, %476, %441 : vector<8x32xi1>, vector<8x32xf32>
    %504 = vector.shape_cast %500 : vector<8x1xi1> to vector<8x1xi1>
    %505 = vector.broadcast %504 : vector<8x1xi1> to vector<8x32xi1>
    %506 = arith.select %505, %496, %447 : vector<8x32xi1>, vector<8x32xf32>
    %c7_83 = arith.constant 7 : index
    %c0_84 = arith.constant 0 : index
    %c0_85 = arith.constant 0 : index
    %507 = vector.load %arg15[%c7_83, %c0_84, %c0_85] : memref<8x8x32xf32, #tpu.memory_space<vmem>>, vector<1x8x32xf32>
    %508 = vector.shape_cast %507 : vector<1x8x32xf32> to vector<8x32xf32>
    %509 = vector.shape_cast %503 : vector<8x32xf32> to vector<1x8x32xf32>
    tpu.vector_store %arg15[%c7_83, %c0_84, %c0_85], %509 {strides = array<i32>} : memref<8x8x32xf32, #tpu.memory_space<vmem>>, vector<1x8x32xf32>,
    %c0_86 = arith.constant 0 : index
    %c0_87 = arith.constant 0 : index
    %c0_88 = arith.constant 0 : index
    %510 = vector.load %arg16[%c0_86, %c0_87, %c0_88] : memref<8x8x32xf32, #tpu.memory_space<vmem>>, vector<1x8x32xf32>
    %511 = vector.shape_cast %510 : vector<1x8x32xf32> to vector<8x32xf32>
    %512 = vector.shape_cast %506 : vector<8x32xf32> to vector<1x8x32xf32>
    tpu.vector_store %arg16[%c0_86, %c0_87, %c0_88], %512 {strides = array<i32>} : memref<8x8x32xf32, #tpu.memory_space<vmem>>, vector<1x8x32xf32>,
    %c0_89 = arith.constant 0 : index
    %c0_90 = arith.constant 0 : index
    %c0_91 = arith.constant 0 : index
    %513 = vector.load %arg15[%c0_89, %c0_90, %c0_91] : memref<8x8x32xf32, #tpu.memory_space<vmem>>, vector<8x8x32xf32>
    %c0_92 = arith.constant 0 : index
    %c0_93 = arith.constant 0 : index
    %c0_94 = arith.constant 0 : index
    %514 = vector.load %arg16[%c0_92, %c0_93, %c0_94] : memref<8x8x32xf32, #tpu.memory_space<vmem>>, vector<8x8x32xf32>
    %515 = tpu.concatenate %513, %514 in 2 : vector<8x8x32xf32>, vector<8x8x32xf32> -> vector<8x8x64xf32>
    %516 = vector.broadcast %6 : vector<8x8x1xf32> to vector<8x8x64xf32>
    %517 = arith.mulf %515, %516 : vector<8x8x64xf32>
    %518 = vector.shape_cast %517 : vector<8x8x64xf32> to vector<64x64xf32>
    %519 = arith.truncf %518 : vector<64x64xf32> to vector<64x64xbf16>
    %c0_95 = arith.constant 0 : index
    %c0_96 = arith.constant 0 : index
    %520 = vector.load %arg7[%c0_95, %c0_96] : memref<64x64xbf16, #tpu.memory_space<vmem>>, vector<64x64xbf16>
    %cst_97 = arith.constant dense<0.000000e+00> : vector<64x64xf32>
    %521 = tpu.matmul %519, %520, %cst_97 {dimension_numbers = #tpu.dot_dimension_numbers<[1], [0], [0], [1], [0, 0, 1, 1], [], []>} : vector<64x64xbf16>, vector<64x64xbf16>, vector<64x64xf32> -> vector<64x64xf32>
    %c0_98 = arith.constant 0 : index
    %c0_99 = arith.constant 0 : index
    %522 = vector.load %arg8[%c0_98, %c0_99] : memref<1x64xf32, #tpu.memory_space<vmem>>, vector<1x64xf32>
    %523 = vector.broadcast %522 : vector<1x64xf32> to vector<64x64xf32>
    %524 = arith.addf %521, %523 : vector<64x64xf32>
    %525 = math.tanh %524 : vector<64x64xf32>
    %526 = vector.shape_cast %525 : vector<64x64xf32> to vector<8x8x64xf32>
    %c0_100 = arith.constant 0 : index
    %c0_101 = arith.constant 0 : index
    %527 = vector.load %arg9[%c0_100, %c0_101] : memref<1x64xf32, #tpu.memory_space<vmem>>, vector<1x64xf32>
    %528 = vector.shape_cast %527 : vector<1x64xf32> to vector<1x1x64xf32>
    %529 = vector.broadcast %528 : vector<1x1x64xf32> to vector<8x8x64xf32>
    %530 = arith.mulf %526, %529 : vector<8x8x64xf32>
    %cst_102 = arith.constant dense<0.000000e+00> : vector<8x8xf32>
    %531 = vector.multi_reduction <add>, %530, %cst_102 [2] : vector<8x8x64xf32> to vector<8x8xf32>
    %532 = vector.shape_cast %531 : vector<8x8xf32> to vector<8x8x1xf32>
    %cst_103 = arith.constant dense<0xFF800000> : vector<8x1xf32>
    %533 = vector.multi_reduction <maximumf>, %532, %cst_103 [0] : vector<8x8x1xf32> to vector<8x1xf32>
    %534 = vector.shape_cast %533 : vector<8x1xf32> to vector<1x8x1xf32>
    %535 = vector.broadcast %534 : vector<1x8x1xf32> to vector<8x8x1xf32>
    %536 = arith.subf %532, %535 : vector<8x8x1xf32>
    %537 = math.exp %536 : vector<8x8x1xf32>
    %cst_104 = arith.constant dense<0.000000e+00> : vector<8x1xf32>
    %538 = vector.multi_reduction <add>, %537, %cst_104 [0] : vector<8x8x1xf32> to vector<8x1xf32>
    %539 = vector.shape_cast %538 : vector<8x1xf32> to vector<1x8x1xf32>
    %540 = tpu.reciprocal %539 {approx = true} : vector<1x8x1xf32> -> vector<1x8x1xf32>
    %541 = vector.broadcast %540 : vector<1x8x1xf32> to vector<8x8x1xf32>
    %542 = arith.mulf %537, %541 : vector<8x8x1xf32>
    %543 = vector.broadcast %542 : vector<8x8x1xf32> to vector<8x8x64xf32>
    %544 = arith.mulf %517, %543 : vector<8x8x64xf32>
    %cst_105 = arith.constant dense<0.000000e+00> : vector<8x64xf32>
    %545 = vector.multi_reduction <add>, %544, %cst_105 [0] : vector<8x8x64xf32> to vector<8x64xf32>
    %546 = arith.truncf %545 : vector<8x64xf32> to vector<8x64xbf16>
    %c0_106 = arith.constant 0 : index
    %c0_107 = arith.constant 0 : index
    %547 = vector.load %arg10[%c0_106, %c0_107] : memref<64x64xbf16, #tpu.memory_space<vmem>>, vector<64x64xbf16>
    %cst_108 = arith.constant dense<0.000000e+00> : vector<8x64xf32>
    %548 = tpu.matmul %546, %547, %cst_108 {dimension_numbers = #tpu.dot_dimension_numbers<[1], [0], [0], [1], [0, 0, 1, 1], [], []>} : vector<8x64xbf16>, vector<64x64xbf16>, vector<8x64xf32> -> vector<8x64xf32>
    %c0_109 = arith.constant 0 : index
    %c0_110 = arith.constant 0 : index
    %549 = vector.load %arg11[%c0_109, %c0_110] : memref<1x64xf32, #tpu.memory_space<vmem>>, vector<1x64xf32>
    %550 = vector.broadcast %549 : vector<1x64xf32> to vector<8x64xf32>
    %551 = arith.addf %548, %550 : vector<8x64xf32>
    %cst_111 = arith.constant 0.000000e+00 : f32
    %552 = vector.broadcast %cst_111 : f32 to vector<8x64xf32>
    %553 = arith.maximumf %551, %552 : vector<8x64xf32>
    %554 = arith.truncf %553 : vector<8x64xf32> to vector<8x64xbf16>
    %c0_112 = arith.constant 0 : index
    %c0_113 = arith.constant 0 : index
    %555 = vector.load %arg12[%c0_112, %c0_113] : memref<64x3xbf16, #tpu.memory_space<vmem>>, vector<64x3xbf16>
    %cst_114 = arith.constant dense<0.000000e+00> : vector<8x3xf32>
    %556 = tpu.matmul %554, %555, %cst_114 {dimension_numbers = #tpu.dot_dimension_numbers<[1], [0], [0], [1], [0, 0, 1, 1], [], []>} : vector<8x64xbf16>, vector<64x3xbf16>, vector<8x3xf32> -> vector<8x3xf32>
    %c0_115 = arith.constant 0 : index
    %c0_116 = arith.constant 0 : index
    %557 = vector.load %arg13[%c0_115, %c0_116] : memref<1x3xf32, #tpu.memory_space<vmem>>, vector<1x3xf32>
    %558 = vector.broadcast %557 : vector<1x3xf32> to vector<8x3xf32>
    %559 = arith.addf %556, %558 : vector<8x3xf32>
    %560 = arith.negf %559 : vector<8x3xf32>
    %561 = math.exp %560 : vector<8x3xf32>
    %cst_117 = arith.constant 1.000000e+00 : f32
    %562 = vector.broadcast %cst_117 : f32 to vector<8x3xf32>
    %563 = arith.addf %562, %561 : vector<8x3xf32>
    %564 = arith.divf %562, %563 : vector<8x3xf32>
    %c0_118 = arith.constant 0 : index
    %c0_119 = arith.constant 0 : index
    %565 = vector.load %arg14[%c0_118, %c0_119] : memref<8x3xf32, #tpu.memory_space<vmem>>, vector<8x3xf32>
    tpu.vector_store %arg14[%c0_118, %c0_119], %564 {strides = array<i32>} : memref<8x3xf32, #tpu.memory_space<vmem>>, vector<8x3xf32>,
    return
  }
  func.func @transform_0(%arg0: i32) -> (i32, i32, i32) {
    %c0_i32 = arith.constant 0 : i32
    %c0_i32_0 = arith.constant 0 : i32
    %c0_i32_1 = arith.constant 0 : i32
    return %c0_i32, %arg0, %c0_i32_0 : i32, i32, i32
  }
  func.func @transform_1(%arg0: i32) -> (i32, i32) {
    %c0_i32 = arith.constant 0 : i32
    %c0_i32_0 = arith.constant 0 : i32
    return %arg0, %c0_i32 : i32, i32
  }
  func.func @transform_2(%arg0: i32) -> (i32, i32) {
    %c0_i32 = arith.constant 0 : i32
    %c0_i32_0 = arith.constant 0 : i32
    %c0_i32_1 = arith.constant 0 : i32
    return %c0_i32, %c0_i32_0 : i32, i32
  }
  func.func @transform_3(%arg0: i32) -> (i32, i32) {
    %c0_i32 = arith.constant 0 : i32
    %c0_i32_0 = arith.constant 0 : i32
    %c0_i32_1 = arith.constant 0 : i32
    return %c0_i32, %c0_i32_0 : i32, i32
  }
  func.func @transform_4(%arg0: i32) -> (i32, i32) {
    %c0_i32 = arith.constant 0 : i32
    %c0_i32_0 = arith.constant 0 : i32
    %c0_i32_1 = arith.constant 0 : i32
    return %c0_i32, %c0_i32_0 : i32, i32
  }
  func.func @transform_5(%arg0: i32) -> (i32, i32) {
    %c0_i32 = arith.constant 0 : i32
    %c0_i32_0 = arith.constant 0 : i32
    %c0_i32_1 = arith.constant 0 : i32
    return %c0_i32, %c0_i32_0 : i32, i32
  }
  func.func @transform_6(%arg0: i32) -> (i32, i32) {
    %c0_i32 = arith.constant 0 : i32
    %c0_i32_0 = arith.constant 0 : i32
    %c0_i32_1 = arith.constant 0 : i32
    return %c0_i32, %c0_i32_0 : i32, i32
  }
  func.func @transform_7(%arg0: i32) -> (i32, i32) {
    %c0_i32 = arith.constant 0 : i32
    %c0_i32_0 = arith.constant 0 : i32
    %c0_i32_1 = arith.constant 0 : i32
    return %c0_i32, %c0_i32_0 : i32, i32
  }
  func.func @transform_8(%arg0: i32) -> (i32, i32) {
    %c0_i32 = arith.constant 0 : i32
    %c0_i32_0 = arith.constant 0 : i32
    %c0_i32_1 = arith.constant 0 : i32
    return %c0_i32, %c0_i32_0 : i32, i32
  }
  func.func @transform_9(%arg0: i32) -> (i32, i32) {
    %c0_i32 = arith.constant 0 : i32
    %c0_i32_0 = arith.constant 0 : i32
    %c0_i32_1 = arith.constant 0 : i32
    return %c0_i32, %c0_i32_0 : i32, i32
  }
  func.func @transform_10(%arg0: i32) -> (i32, i32) {
    %c0_i32 = arith.constant 0 : i32
    %c0_i32_0 = arith.constant 0 : i32
    %c0_i32_1 = arith.constant 0 : i32
    return %c0_i32, %c0_i32_0 : i32, i32
  }
  func.func @transform_11(%arg0: i32) -> (i32, i32) {
    %c0_i32 = arith.constant 0 : i32
    %c0_i32_0 = arith.constant 0 : i32
    %c0_i32_1 = arith.constant 0 : i32
    return %c0_i32, %c0_i32_0 : i32, i32
  }
  func.func @transform_12(%arg0: i32) -> (i32, i32) {
    %c0_i32 = arith.constant 0 : i32
    %c0_i32_0 = arith.constant 0 : i32
    %c0_i32_1 = arith.constant 0 : i32
    return %c0_i32, %c0_i32_0 : i32, i32
  }
  func.func @transform_13(%arg0: i32) -> (i32, i32) {
    %c0_i32 = arith.constant 0 : i32
    %c0_i32_0 = arith.constant 0 : i32
    return %arg0, %c0_i32 : i32, i32
  }
}

</mosaic_0001>

<llo_original>
// kernel: tpu_custom_call.1
$region0: #{tpu_custom_call.1}
  #allocation0 [shape = 'u32[]', space=smem, size = 0x4, offset = 0x4, fixed_abs, tag = 'smem constant byte address 0x4 - core index']
  #allocation1 [shape = 'u32[72,128]{1,0:T(1,128)}', space=vmem, size = 0x9000, scoped, tag = 'internal scratch']
  #allocation2 [shape = 'f32[8,8,32]{2,1,0:T(8,128)}', space=vmem, size = 0x8000, scoped, tag = 'scratch operand']
  #allocation3 [shape = 'f32[8,8,32]{2,1,0:T(8,128)}', space=vmem, size = 0x8000, scoped, tag = 'scratch operand']
  %s0 = inlined_call_operand.vmem [shape: bf16[8,8,16], index: 0, kind: input, shape index: {}]
  %s1 = inlined_call_operand.vmem [shape: s32[8,1], index: 1, kind: input, shape index: {}]
  %s2 = inlined_call_operand.hbm [shape: bf16[16,256], index: 2, kind: input, shape index: {}]
  %s3 = inlined_call_operand.vmem [shape: f32[1,256], index: 3, kind: input, shape index: {}]
  %s4 = inlined_call_operand.hbm [shape: bf16[32,128], index: 4, kind: input, shape index: {}]
  %s5 = inlined_call_operand.hbm [shape: bf16[32,128], index: 5, kind: input, shape index: {}]
  %s6 = inlined_call_operand.hbm [shape: bf16[64,64], index: 6, kind: input, shape index: {}]
  %s7 = inlined_call_operand.vmem [shape: f32[1,64], index: 7, kind: input, shape index: {}]
  %s8 = inlined_call_operand.vmem [shape: f32[1,64], index: 8, kind: input, shape index: {}]
  %s9 = inlined_call_operand.hbm [shape: bf16[64,64], index: 9, kind: input, shape index: {}]
  %s10 = inlined_call_operand.vmem [shape: f32[1,64], index: 10, kind: input, shape index: {}]
  %s11 = inlined_call_operand.vmem [shape: bf16[64,3], index: 11, kind: input, shape index: {}]
  %s12 = inlined_call_operand.vmem [shape: f32[1,3], index: 12, kind: input, shape index: {}]
  %s13 = inlined_call_operand.vmem [shape: f32[8,3], index: 13, kind: output, shape index: {}]
  %s14 = sld [smem:[#allocation0]]
  $region82: #{tpu_custom_call.1} parent=0
    _
  %s16 = ssub.s32 1, %s14
  %s17 = scalar_select 0, %s16, %s14
  $region1: #{tpu_custom_call.1} parent=0
    #allocation4 [shape = 'u8[8192]{0}', space=vmem, size = 0x2000, scoped, tag = 'input window, operand 2, single buffered']
    #allocation5 [shape = 's32[1]{0}', space=sflag, size = 0x4, scoped, tag = 'scoped memory for tpu_custom_call.1']
    #allocation6 [shape = 'u8[8192]{0}', space=vmem, size = 0x2000, scoped, tag = 'input window, operand 4, single buffered']
    #allocation7 [shape = 's32[1]{0}', space=sflag, size = 0x4, scoped, tag = 'scoped memory for tpu_custom_call.1']
    #allocation8 [shape = 'u8[8192]{0}', space=vmem, size = 0x2000, scoped, tag = 'input window, operand 5, single buffered']
    #allocation9 [shape = 'u8[16384]{0}', space=vmem, size = 0x4000, scoped, tag = 'input window, operand 6, single buffered']
    #allocation10 [shape = 's32[1]{0}', space=sflag, size = 0x4, scoped, tag = 'scoped memory for tpu_custom_call.1']
    #allocation11 [shape = 'u8[16384]{0}', space=vmem, size = 0x4000, scoped, tag = 'input window, operand 9, single buffered']
    %18 = vsyncpa [#allocation5], 0
    %19 = vsyncpa [#allocation7], 0
    %20 = vsyncpa [#allocation10], 0
    // Predicated region
    $region2: #{tpu_custom_call.1} parent=1 // pred_check
      _
    $region3: #{tpu_custom_call.1} parent=1 // pred_check_branch
      %22 = sbr.rel (0) target = $region5
    $region4: #{tpu_custom_call.1} parent=1 // pred_region
      _
    $region5: #{tpu_custom_call.1} parent=1 // pred_fallthru
      _
    // Predicated region
    $region6: #{tpu_custom_call.1} parent=1 // pred_check
      _
    $region7: #{tpu_custom_call.1} parent=1 // pred_check_branch
      %24 = sbr.rel (0) target = $region9
    $region8: #{tpu_custom_call.1} parent=1 // pred_region
      _
    $region9: #{tpu_custom_call.1} parent=1 // pred_fallthru
      _
    // Predicated region
    $region10: #{tpu_custom_call.1} parent=1 // pred_check
      _
    $region11: #{tpu_custom_call.1} parent=1 // pred_check_branch
      %26 = sbr.rel (0) target = $region13
    $region12: #{tpu_custom_call.1} parent=1 // pred_region
      %28 = vsyncadd [#allocation5], 0
      %s29 = sshll.u32 %s2, 4
      %s30 = int_to_ptr.hbm [resolvable:$true] %s29
      %s31 = sshll.u32 [#allocation4], 4
      %s32 = int_to_ptr.vmem [resolvable:$true] %s31
      %37 = dma.hbm_to_vmem [thread:$0]  %s30, 256, %s32, [#allocation5], 128, 128, 8
    $region13: #{tpu_custom_call.1} parent=1 // pred_fallthru
      _
    // Predicated region
    $region14: #{tpu_custom_call.1} parent=1 // pred_check
      _
    $region15: #{tpu_custom_call.1} parent=1 // pred_check_branch
      %39 = sbr.rel (0) target = $region17
    $region16: #{tpu_custom_call.1} parent=1 // pred_region
      _
    $region17: #{tpu_custom_call.1} parent=1 // pred_fallthru
      _
    // Predicated region
    $region18: #{tpu_custom_call.1} parent=1 // pred_check
      _
    $region19: #{tpu_custom_call.1} parent=1 // pred_check_branch
      %41 = sbr.rel (0) target = $region21
    $region20: #{tpu_custom_call.1} parent=1 // pred_region
      %43 = vsyncadd [#allocation7], 0
      %s44 = sshll.u32 %s4, 4
      %s45 = int_to_ptr.hbm [resolvable:$true] %s44
      %s46 = sshll.u32 [#allocation6], 4
      %s47 = int_to_ptr.vmem [resolvable:$true] %s46
      %52 = dma.hbm_to_vmem [thread:$0]  %s45, 256, %s47, [#allocation7], 64, 64, 4
    $region21: #{tpu_custom_call.1} parent=1 // pred_fallthru
      _
    // Predicated region
    $region22: #{tpu_custom_call.1} parent=1 // pred_check
      _
    $region23: #{tpu_custom_call.1} parent=1 // pred_check_branch
      %54 = sbr.rel (0) target = $region25
    $region24: #{tpu_custom_call.1} parent=1 // pred_region
      %56 = vsyncadd [#allocation7], 0
      %s57 = sshll.u32 %s5, 4
      %s58 = int_to_ptr.hbm [resolvable:$true] %s57
      %s59 = sshll.u32 [#allocation8], 4
      %s60 = int_to_ptr.vmem [resolvable:$true] %s59
      %65 = dma.hbm_to_vmem [thread:$0]  %s58, 256, %s60, [#allocation7], 64, 64, 4
    $region25: #{tpu_custom_call.1} parent=1 // pred_fallthru
      _
    // Predicated region
    $region26: #{tpu_custom_call.1} parent=1 // pred_check
      _
    $region27: #{tpu_custom_call.1} parent=1 // pred_check_branch
      %67 = sbr.rel (0) target = $region29
    $region28: #{tpu_custom_call.1} parent=1 // pred_region
      %69 = vsyncadd [#allocation10], 0
      %s70 = sshll.u32 %s6, 4
      %s71 = int_to_ptr.hbm [resolvable:$true] %s70
      %s72 = sshll.u32 [#allocation9], 4
      %s73 = int_to_ptr.vmem [resolvable:$true] %s72
      %78 = dma.hbm_to_vmem [thread:$0]  %s71, 512, %s73, [#allocation10], 64, 64, 4
    $region29: #{tpu_custom_call.1} parent=1 // pred_fallthru
      _
    // Predicated region
    $region30: #{tpu_custom_call.1} parent=1 // pred_check
      _
    $region31: #{tpu_custom_call.1} parent=1 // pred_check_branch
      %80 = sbr.rel (0) target = $region33
    $region32: #{tpu_custom_call.1} parent=1 // pred_region
      _
    $region33: #{tpu_custom_call.1} parent=1 // pred_fallthru
      _
    // Predicated region
    $region34: #{tpu_custom_call.1} parent=1 // pred_check
      _
    $region35: #{tpu_custom_call.1} parent=1 // pred_check_branch
      %82 = sbr.rel (0) target = $region37
    $region36: #{tpu_custom_call.1} parent=1 // pred_region
      _
    $region37: #{tpu_custom_call.1} parent=1 // pred_fallthru
      _
    // Predicated region
    $region38: #{tpu_custom_call.1} parent=1 // pred_check
      _
    $region39: #{tpu_custom_call.1} parent=1 // pred_check_branch
      %84 = sbr.rel (0) target = $region41
    $region40: #{tpu_custom_call.1} parent=1 // pred_region
      %86 = vsyncadd [#allocation10], 0
      %s87 = sshll.u32 %s9, 4
      %s88 = int_to_ptr.hbm [resolvable:$true] %s87
      %s89 = sshll.u32 [#allocation11], 4
      %s90 = int_to_ptr.vmem [resolvable:$true] %s89
      %95 = dma.hbm_to_vmem [thread:$0]  %s88, 512, %s90, [#allocation10], 64, 64, 4
    $region41: #{tpu_custom_call.1} parent=1 // pred_fallthru
      _
    // Predicated region
    $region42: #{tpu_custom_call.1} parent=1 // pred_check
      _
    $region43: #{tpu_custom_call.1} parent=1 // pred_check_branch
      %97 = sbr.rel (0) target = $region45
    $region44: #{tpu_custom_call.1} parent=1 // pred_region
      _
    $region45: #{tpu_custom_call.1} parent=1 // pred_fallthru
      _
    // Predicated region
    $region46: #{tpu_custom_call.1} parent=1 // pred_check
      _
    $region47: #{tpu_custom_call.1} parent=1 // pred_check_branch
      %99 = sbr.rel (0) target = $region49
    $region48: #{tpu_custom_call.1} parent=1 // pred_region
      _
    $region49: #{tpu_custom_call.1} parent=1 // pred_fallthru
      _
    // Predicated region
    $region50: #{tpu_custom_call.1} parent=1 // pred_check
      _
    $region51: #{tpu_custom_call.1} parent=1 // pred_check_branch
      %101 = sbr.rel (0) target = $region53
    $region52: #{tpu_custom_call.1} parent=1 // pred_region
      _
    $region53: #{tpu_custom_call.1} parent=1 // pred_fallthru
      _
    // Predicated region
    $region54: #{tpu_custom_call.1} parent=1 // pred_check
      _
    $region55: #{tpu_custom_call.1} parent=1 // pred_check_branch
      %103 = sbr.rel (0) target = $region57
    $region56: #{tpu_custom_call.1} parent=1 // pred_region
      %105 = dma.done [#allocation5], 256
    $region57: #{tpu_custom_call.1} parent=1 // pred_fallthru
      _
    // Predicated region
    $region58: #{tpu_custom_call.1} parent=1 // pred_check
      _
    $region59: #{tpu_custom_call.1} parent=1 // pred_check_branch
      %107 = sbr.rel (0) target = $region61
    $region60: #{tpu_custom_call.1} parent=1 // pred_region
      %109 = dma.done [#allocation7], 256
    $region61: #{tpu_custom_call.1} parent=1 // pred_fallthru
      _
    // Predicated region
    $region62: #{tpu_custom_call.1} parent=1 // pred_check
      _
    $region63: #{tpu_custom_call.1} parent=1 // pred_check_branch
      %111 = sbr.rel (0) target = $region65
    $region64: #{tpu_custom_call.1} parent=1 // pred_region
      %113 = dma.done [#allocation7], 256
    $region65: #{tpu_custom_call.1} parent=1 // pred_fallthru
      _
    // Predicated region
    $region66: #{tpu_custom_call.1} parent=1 // pred_check
      _
    $region67: #{tpu_custom_call.1} parent=1 // pred_check_branch
      %115 = sbr.rel (0) target = $region69
    $region68: #{tpu_custom_call.1} parent=1 // pred_region
      %117 = dma.done [#allocation10], 512
    $region69: #{tpu_custom_call.1} parent=1 // pred_fallthru
      _
    // Predicated region
    $region70: #{tpu_custom_call.1} parent=1 // pred_check
      _
    $region71: #{tpu_custom_call.1} parent=1 // pred_check_branch
      %119 = sbr.rel (0) target = $region73
    $region72: #{tpu_custom_call.1} parent=1 // pred_region
      %121 = dma.done [#allocation10], 512
    $region73: #{tpu_custom_call.1} parent=1 // pred_fallthru
      _
    %v123 = vld [vmem:[%s1] sm:$0xff]
    %vm124 = vcmp.gt.s32.totalorder %v123, 0
    %vm125 = vcmp.gt.s32.totalorder %v123, 1
    %vm126 = vcmp.gt.s32.totalorder %v123, 2
    %vm127 = vcmp.gt.s32.totalorder %v123, 3
    %vm128 = vcmp.gt.s32.totalorder %v123, 4
    %vm129 = vcmp.gt.s32.totalorder %v123, 5
    %vm130 = vcmp.gt.s32.totalorder %v123, 6
    %vm131 = vcmp.gt.s32.totalorder %v123, 7
    %v132 = vsel %vm124, 1, 0
    %v133 = vsel %vm125, 1, 0
    %v134 = vsel %vm126, 1, 0
    %v135 = vsel %vm127, 1, 0
    %v136 = vsel %vm128, 1, 0
    %v137 = vsel %vm129, 1, 0
    %v138 = vsel %vm130, 1, 0
    %v139 = vsel %vm131, 1, 0
    %v140 = vcvt.s32.f32 %v132
    %v141 = vcvt.s32.f32 %v133
    %v142 = vcvt.s32.f32 %v134
    %v143 = vcvt.s32.f32 %v135
    %v144 = vcvt.s32.f32 %v136
    %v145 = vcvt.s32.f32 %v137
    %v146 = vcvt.s32.f32 %v138
    %v147 = vcvt.s32.f32 %v139
    %v148 = vld [vmem:[%s0] sm:$0xf]
    %v149 = vld [vmem:[%s0 + $0x4] sm:$0xf]
    %v150 = vld [vmem:[%s0 + $0x8] sm:$0xf]
    %v151 = vld [vmem:[%s0 + $0xc] sm:$0xf]
    %v152 = vld [vmem:[%s0 + $0x10] sm:$0xf]
    %v153 = vld [vmem:[%s0 + $0x14] sm:$0xf]
    %v154 = vld [vmem:[%s0 + $0x18] sm:$0xf]
    %v155 = vld [vmem:[%s0 + $0x1c] sm:$0xf]
    %v156 = vld [vmem:[#allocation4] sm:$0xff]
    %v157 = vld [vmem:[#allocation4 + $0x8] sm:$0xff]
    %v158 = vld [vmem:[%s3] sm:$0x3]
    %v160 = vperm.slane %v158, 0
    %v161 = vperm.slane %v158, 1
    %v172 = vunpack.c.l.b16 %v148
    %v173 = vunpack.c.l.b16 %v149
    %v174 = vunpack.c.l.b16 %v150
    %v175 = vunpack.c.l.b16 %v151
    %v176 = vunpack.c.l.b16 %v152
    %v177 = vunpack.c.l.b16 %v153
    %v178 = vunpack.c.l.b16 %v154
    %v179 = vunpack.c.l.b16 %v155
    %v180 = vpack.c.b16 %v173, %v172
    %v181 = vpack.c.b16 %v175, %v174
    %v182 = vpack.c.b16 %v177, %v176
    %v183 = vpack.c.b16 %v179, %v178
    %v186 = vunpack.c.l.b16 %v156
    %v187 = vunpack.c.h.b16 %v156
    %v188 = vunpack.c.l.b16 %v157
    %v189 = vunpack.c.h.b16 %v157
    %v190 = vpack.c.b16 %v188, %v186
    %v191 = vpack.c.b16 %v189, %v187
    %vm194 = vcmask 130048
    %v196 = vsel %vm194, %v180, 0
    %v199 = vsel %vm194, %v181, 0
    %v202 = vsel %vm194, %v182, 0
    %v205 = vsel %vm194, %v183, 0
    %207 = vmatpush.bf16.msra.mxu0 0
    %208 = vmatpush.bf16.msra.mxu0 0
    %209 = vmatpush.bf16.msra.mxu0 0
    %210 = vmatpush.bf16.msra.mxu0 0
    %211 = vmatpush.bf16.msra.mxu0 0
    %212 = vmatpush.bf16.msra.mxu0 0
    %213 = vmatpush.bf16.msra.mxu0 0
    %214 = vmatpush.bf16.msra.mxu0 %v190
    %215 = vmatmul.bf16.gmra.mxu0 %v196
    %v216 = vpop.f32.mrf.mxu0
    %v217 = vadd.f32 %v160, %v216
    %v218 = vpop.f32.mrf.mxu0
    %v219 = vadd.f32 %v160, %v218
    %220 = vmatmul.bf16.gmra.mxu0 %v199
    %v221 = vpop.f32.mrf.mxu0
    %v222 = vadd.f32 %v160, %v221
    %v223 = vpop.f32.mrf.mxu0
    %v224 = vadd.f32 %v160, %v223
    %225 = vmatmul.bf16.gmra.mxu0 %v202
    %v226 = vpop.f32.mrf.mxu0
    %v227 = vadd.f32 %v160, %v226
    %v228 = vpop.f32.mrf.mxu0
    %v229 = vadd.f32 %v160, %v228
    %230 = vmatmul.bf16.gmra.mxu0 %v205
    %v231 = vpop.f32.mrf.mxu0
    %v232 = vadd.f32 %v160, %v231
    %v233 = vpop.f32.mrf.mxu0
    %v234 = vadd.f32 %v160, %v233
    %235 = vdwg.mxu0
    %236 = vmatpush.bf16.msra.mxu0 0
    %237 = vmatpush.bf16.msra.mxu0 0
    %238 = vmatpush.bf16.msra.mxu0 0
    %239 = vmatpush.bf16.msra.mxu0 0
    %240 = vmatpush.bf16.msra.mxu0 0
    %241 = vmatpush.bf16.msra.mxu0 0
    %242 = vmatpush.bf16.msra.mxu0 0
    %243 = vmatpush.bf16.msra.mxu0 %v191
    %244 = vmatmul.bf16.gmra.mxu0 %v196
    %v245 = vpop.f32.mrf.mxu0
    %v246 = vadd.f32 %v161, %v245
    %v247 = vpop.f32.mrf.mxu0
    %v248 = vadd.f32 %v161, %v247
    %249 = vmatmul.bf16.gmra.mxu0 %v199
    %v250 = vpop.f32.mrf.mxu0
    %v251 = vadd.f32 %v161, %v250
    %v252 = vpop.f32.mrf.mxu0
    %v253 = vadd.f32 %v161, %v252
    %254 = vmatmul.bf16.gmra.mxu0 %v202
    %v255 = vpop.f32.mrf.mxu0
    %v256 = vadd.f32 %v161, %v255
    %v257 = vpop.f32.mrf.mxu0
    %v258 = vadd.f32 %v161, %v257
    %259 = vmatmul.bf16.gmra.mxu0 %v205
    %v260 = vpop.f32.mrf.mxu0
    %v261 = vadd.f32 %v161, %v260
    %v262 = vpop.f32.mrf.mxu0
    %v263 = vadd.f32 %v161, %v262
    %264 = vdwg.mxu0
    %v265 = vld [vmem:[#allocation6] sm:$0xf]
    %v266 = vld [vmem:[#allocation6 + $0x4] sm:$0xf]
    %v267 = vld [vmem:[#allocation6 + $0x8] sm:$0xf]
    %v268 = vld [vmem:[#allocation6 + $0xc] sm:$0xf]
    %v269 = vld [vmem:[#allocation8] sm:$0xf]
    %v270 = vld [vmem:[#allocation8 + $0x4] sm:$0xf]
    %v271 = vld [vmem:[#allocation8 + $0x8] sm:$0xf]
    %v272 = vld [vmem:[#allocation8 + $0xc] sm:$0xf]
    %v277 = vunpack.c.l.b16 %v265
    %v278 = vunpack.c.l.b16 %v266
    %v279 = vunpack.c.l.b16 %v267
    %v280 = vunpack.c.l.b16 %v268
    %v281 = vpack.c.b16 %v278, %v277
    %v282 = vpack.c.b16 %v280, %v279
    %vm285 = vcmask 261120
    %v287 = vsel %vm285, 0, 0
    %289 = vmatpush.bf16.msra.mxu0 0
    %290 = vmatpush.bf16.msra.mxu0 0
    %291 = vmatpush.bf16.msra.mxu0 0
    %292 = vmatpush.bf16.msra.mxu0 0
    %293 = vmatpush.bf16.msra.mxu0 0
    %294 = vmatpush.bf16.msra.mxu0 0
    %295 = vmatpush.bf16.msra.mxu0 %v282
    %296 = vmatpush.bf16.msra.mxu0 %v281
    %297 = vmatmul.bf16.gmra.mxu0 %v287
    %v298 = vpop.f32.mrf.mxu0
    %v299 = vadd.f32 0.0, %v298
    %v300 = vpop.f32.mrf.mxu0
    %301 = vdwg.mxu0
    %v302 = vadd.f32 %v217, %v299
    %v303 = vxor.u32 %v302, 2147483648
    %v304 = vmul.f32 %v303, 1.442695
    %v305 = vpow.pop %v304
    %v306 = vadd.f32 %v305, 1.0
    %v307 = vrcp.pop %v306
    %v308 = vmul.f32 %v306, %v307
    %v309 = vsub.f32 1.0, %v308
    %v310 = vmul.f32 %v307, %v309
    %v311 = vadd.f32 %v307, %v310
    %vm312 = vweird.f32 %v306
    %vm313 = vweird.f32 %v307
    %vm314 = vmor %vm312, %vm313
    %v315 = vsel %vm314, %v307, %v311
    %v316 = vand.u32 2147483647, %v306
    %vm317 = vcmp.eq.f32.partialorder %v316, 8.507059e+37
    %v318 = vand.u32 %v306, 2147483648
    %v319 = vor.u32 1.1754944e-38, %v318
    %v320 = vsel %vm317, %v319, %v315
    %v321 = vmul.f32 1.0, %v320
    %v322 = vtanh.pop %v302
    %v323 = vmul.f32 %v321, 0.0
    %325 = vrot.lane.b32.xlu0 %v322, 64
    %v326 = vpop.permute.xlu0 %325
    %v328 = vmul.f32 %v321, %v326
    %330 = vrot.lane.b32.xlu0 %v328, 32
    %v331 = vpop.permute.xlu0 %330
    %v333 = vadd.f32 %v323, %v331
    %v334 = vtanh.pop %v333
    %336 = vrot.lane.b32.xlu0 %v334, 64
    %v337 = vpop.permute.xlu0 %336
    %v339 = vmul.f32 %v321, %v337
    %v344 = vunpack.c.l.b16 %v269
    %v345 = vunpack.c.l.b16 %v270
    %v346 = vunpack.c.l.b16 %v271
    %v347 = vunpack.c.l.b16 %v272
    %v348 = vpack.c.b16 %v345, %v344
    %v349 = vpack.c.b16 %v347, %v346
    %352 = vmatpush.bf16.msra.mxu0 0
    %353 = vmatpush.bf16.msra.mxu0 0
    %354 = vmatpush.bf16.msra.mxu0 0
    %355 = vmatpush.bf16.msra.mxu0 0
    %356 = vmatpush.bf16.msra.mxu0 0
    %357 = vmatpush.bf16.msra.mxu0 0
    %358 = vmatpush.bf16.msra.mxu0 %v349
    %359 = vmatpush.bf16.msra.mxu0 %v348
    %360 = vmatmul.bf16.gmra.mxu0 %v287
    %v361 = vpop.f32.mrf.mxu0
    %v362 = vadd.f32 0.0, %v361
    %v363 = vpop.f32.mrf.mxu0
    %364 = vdwg.mxu0
    %v365 = vadd.f32 %v263, %v362
    %v366 = vxor.u32 %v365, 2147483648
    %v367 = vmul.f32 %v366, 1.442695
    %v368 = vpow.pop %v367
    %v369 = vadd.f32 %v368, 1.0
    %v370 = vrcp.pop %v369
    %v371 = vmul.f32 %v369, %v370
    %v372 = vsub.f32 1.0, %v371
    %v373 = vmul.f32 %v370, %v372
    %v374 = vadd.f32 %v370, %v373
    %vm375 = vweird.f32 %v369
    %vm376 = vweird.f32 %v370
    %vm377 = vmor %vm375, %vm376
    %v378 = vsel %vm377, %v370, %v374
    %v379 = vand.u32 2147483647, %v369
    %vm380 = vcmp.eq.f32.partialorder %v379, 8.507059e+37
    %v381 = vand.u32 %v369, 2147483648
    %v382 = vor.u32 1.1754944e-38, %v381
    %v383 = vsel %vm380, %v382, %v378
    %v384 = vmul.f32 1.0, %v383
    %v385 = vtanh.pop %v365
    %v386 = vmul.f32 %v384, 0.0
    %388 = vrot.lane.b32.xlu0 %v385, 64
    %v389 = vpop.permute.xlu0 %388
    %v391 = vmul.f32 %v384, %v389
    %393 = vrot.lane.b32.xlu0 %v391, 32
    %v394 = vpop.permute.xlu0 %393
    %v396 = vadd.f32 %v386, %v394
    %v397 = vtanh.pop %v396
    %399 = vrot.lane.b32.xlu0 %v397, 64
    %v400 = vpop.permute.xlu0 %399
    %v402 = vmul.f32 %v384, %v400
    %403 = vset.pattern.permute.xlu0 0
    %404 = vperm.xlu0 %403, %v132
    %v405 = vpop.permute.xlu0 %404
    %vm406 = vcmp.eq.s32.totalorder %v405, 1
    %v407 = vsel %vm406, %v339, 0.0
    %v408 = vsel %vm406, %v333, 0.0
    %409 = vset.pattern.permute.xlu0 0
    %410 = vperm.xlu0 %409, %v139
    %v411 = vpop.permute.xlu0 %410
    %vm412 = vcmp.eq.s32.totalorder %v411, 1
    %v413 = vsel %vm412, %v402, 0.0
    %v414 = vsel %vm412, %v396, 0.0
    %416 = vrot.lane.b32.xlu0 %v407, 32
    %v417 = vpop.permute.xlu0 %416
    %419 = vst.msk [vmem:[#allocation2] sm:$0xff] %vm285, %v417
    %421 = vrot.lane.b32.xlu0 %v413, 32
    %v422 = vpop.permute.xlu0 %421
    %s424 = scalar_lea.vmem [#allocation3], 56
    %425 = vst.msk [vmem:[%s424] sm:$0xff] %vm285, %v422
    %v426 = vpack.c.bf16 %v407, %v407
    %428 = vrot.lane.b32.xlu0 %v426, 32
    %v429 = vpop.permute.xlu0 %428
    %v431 = vsel %vm285, %v429, 0
    %433 = vmatpush.bf16.msra.mxu0 0
    %434 = vmatpush.bf16.msra.mxu0 0
    %435 = vmatpush.bf16.msra.mxu0 0
    %436 = vmatpush.bf16.msra.mxu0 0
    %437 = vmatpush.bf16.msra.mxu0 0
    %438 = vmatpush.bf16.msra.mxu0 0
    %439 = vmatpush.bf16.msra.mxu0 %v282
    %440 = vmatpush.bf16.msra.mxu0 %v281
    %441 = vmatmul.bf16.gmra.mxu0 %v431
    %v442 = vpop.f32.mrf.mxu0
    %v443 = vadd.f32 0.0, %v442
    %v444 = vpop.f32.mrf.mxu0
    %445 = vdwg.mxu0
    %v446 = vadd.f32 %v219, %v443
    %v447 = vxor.u32 %v446, 2147483648
    %v448 = vmul.f32 %v447, 1.442695
    %v449 = vpow.pop %v448
    %v450 = vadd.f32 %v449, 1.0
    %v451 = vrcp.pop %v450
    %v452 = vmul.f32 %v450, %v451
    %v453 = vsub.f32 1.0, %v452
    %v454 = vmul.f32 %v451, %v453
    %v455 = vadd.f32 %v451, %v454
    %vm456 = vweird.f32 %v450
    %vm457 = vweird.f32 %v451
    %vm458 = vmor %vm456, %vm457
    %v459 = vsel %vm458, %v451, %v455
    %v460 = vand.u32 2147483647, %v450
    %vm461 = vcmp.eq.f32.partialorder %v460, 8.507059e+37
    %v462 = vand.u32 %v450, 2147483648
    %v463 = vor.u32 1.1754944e-38, %v462
    %v464 = vsel %vm461, %v463, %v459
    %v465 = vmul.f32 1.0, %v464
    %v466 = vtanh.pop %v446
    %v467 = vmul.f32 %v465, %v408
    %469 = vrot.lane.b32.xlu0 %v466, 64
    %v470 = vpop.permute.xlu0 %469
    %v472 = vmul.f32 %v465, %v470
    %474 = vrot.lane.b32.xlu0 %v472, 32
    %v475 = vpop.permute.xlu0 %474
    %v477 = vadd.f32 %v467, %v475
    %v478 = vtanh.pop %v477
    %480 = vrot.lane.b32.xlu0 %v478, 64
    %v481 = vpop.permute.xlu0 %480
    %v483 = vmul.f32 %v465, %v481
    %v484 = vpack.c.bf16 %v413, %v413
    %486 = vrot.lane.b32.xlu0 %v484, 32
    %v487 = vpop.permute.xlu0 %486
    %v489 = vsel %vm285, %v487, 0
    %491 = vmatpush.bf16.msra.mxu0 0
    %492 = vmatpush.bf16.msra.mxu0 0
    %493 = vmatpush.bf16.msra.mxu0 0
    %494 = vmatpush.bf16.msra.mxu0 0
    %495 = vmatpush.bf16.msra.mxu0 0
    %496 = vmatpush.bf16.msra.mxu0 0
    %497 = vmatpush.bf16.msra.mxu0 %v349
    %498 = vmatpush.bf16.msra.mxu0 %v348
    %499 = vmatmul.bf16.gmra.mxu0 %v489
    %v500 = vpop.f32.mrf.mxu0
    %v501 = vadd.f32 0.0, %v500
    %v502 = vpop.f32.mrf.mxu0
    %503 = vdwg.mxu0
    %v504 = vadd.f32 %v261, %v501
    %v505 = vxor.u32 %v504, 2147483648
    %v506 = vmul.f32 %v505, 1.442695
    %v507 = vpow.pop %v506
    %v508 = vadd.f32 %v507, 1.0
    %v509 = vrcp.pop %v508
    %v510 = vmul.f32 %v508, %v509
    %v511 = vsub.f32 1.0, %v510
    %v512 = vmul.f32 %v509, %v511
    %v513 = vadd.f32 %v509, %v512
    %vm514 = vweird.f32 %v508
    %vm515 = vweird.f32 %v509
    %vm516 = vmor %vm514, %vm515
    %v517 = vsel %vm516, %v509, %v513
    %v518 = vand.u32 2147483647, %v508
    %vm519 = vcmp.eq.f32.partialorder %v518, 8.507059e+37
    %v520 = vand.u32 %v508, 2147483648
    %v521 = vor.u32 1.1754944e-38, %v520
    %v522 = vsel %vm519, %v521, %v517
    %v523 = vmul.f32 1.0, %v522
    %v524 = vtanh.pop %v504
    %v525 = vmul.f32 %v523, %v414
    %527 = vrot.lane.b32.xlu0 %v524, 64
    %v528 = vpop.permute.xlu0 %527
    %v530 = vmul.f32 %v523, %v528
    %532 = vrot.lane.b32.xlu0 %v530, 32
    %v533 = vpop.permute.xlu0 %532
    %v535 = vadd.f32 %v525, %v533
    %v536 = vtanh.pop %v535
    %538 = vrot.lane.b32.xlu0 %v536, 64
    %v539 = vpop.permute.xlu0 %538
    %v541 = vmul.f32 %v523, %v539
    %542 = vset.pattern.permute.xlu0 0
    %543 = vperm.xlu0 %542, %v133
    %v544 = vpop.permute.xlu0 %543
    %vm545 = vcmp.eq.s32.totalorder %v544, 1
    %v546 = vsel %vm545, %v483, %v407
    %v547 = vsel %vm545, %v477, %v408
    %548 = vset.pattern.permute.xlu0 0
    %549 = vperm.xlu0 %548, %v138
    %v550 = vpop.permute.xlu0 %549
    %vm551 = vcmp.eq.s32.totalorder %v550, 1
    %v552 = vsel %vm551, %v541, %v413
    %v553 = vsel %vm551, %v535, %v414
    %555 = vrot.lane.b32.xlu0 %v546, 32
    %v556 = vpop.permute.xlu0 %555
    %s558 = scalar_lea.vmem [#allocation2], 8
    %559 = vst.msk [vmem:[%s558] sm:$0xff] %vm285, %v556
    %561 = vrot.lane.b32.xlu0 %v552, 32
    %v562 = vpop.permute.xlu0 %561
    %s564 = scalar_lea.vmem [#allocation3], 48
    %565 = vst.msk [vmem:[%s564] sm:$0xff] %vm285, %v562
    %v566 = vpack.c.bf16 %v546, %v546
    %568 = vrot.lane.b32.xlu0 %v566, 32
    %v569 = vpop.permute.xlu0 %568
    %v571 = vsel %vm285, %v569, 0
    %573 = vmatpush.bf16.msra.mxu0 0
    %574 = vmatpush.bf16.msra.mxu0 0
    %575 = vmatpush.bf16.msra.mxu0 0
    %576 = vmatpush.bf16.msra.mxu0 0
    %577 = vmatpush.bf16.msra.mxu0 0
    %578 = vmatpush.bf16.msra.mxu0 0
    %579 = vmatpush.bf16.msra.mxu0 %v282
    %580 = vmatpush.bf16.msra.mxu0 %v281
    %581 = vmatmul.bf16.gmra.mxu0 %v571
    %v582 = vpop.f32.mrf.mxu0
    %v583 = vadd.f32 0.0, %v582
    %v584 = vpop.f32.mrf.mxu0
    %585 = vdwg.mxu0
    %v586 = vadd.f32 %v222, %v583
    %v587 = vxor.u32 %v586, 2147483648
    %v588 = vmul.f32 %v587, 1.442695
    %v589 = vpow.pop %v588
    %v590 = vadd.f32 %v589, 1.0
    %v591 = vrcp.pop %v590
    %v592 = vmul.f32 %v590, %v591
    %v593 = vsub.f32 1.0, %v592
    %v594 = vmul.f32 %v591, %v593
    %v595 = vadd.f32 %v591, %v594
    %vm596 = vweird.f32 %v590
    %vm597 = vweird.f32 %v591
    %vm598 = vmor %vm596, %vm597
    %v599 = vsel %vm598, %v591, %v595
    %v600 = vand.u32 2147483647, %v590
    %vm601 = vcmp.eq.f32.partialorder %v600, 8.507059e+37
    %v602 = vand.u32 %v590, 2147483648
    %v603 = vor.u32 1.1754944e-38, %v602
    %v604 = vsel %vm601, %v603, %v599
    %v605 = vmul.f32 1.0, %v604
    %v606 = vtanh.pop %v586
    %v607 = vmul.f32 %v605, %v547
    %609 = vrot.lane.b32.xlu0 %v606, 64
    %v610 = vpop.permute.xlu0 %609
    %v612 = vmul.f32 %v605, %v610
    %614 = vrot.lane.b32.xlu0 %v612, 32
    %v615 = vpop.permute.xlu0 %614
    %v617 = vadd.f32 %v607, %v615
    %v618 = vtanh.pop %v617
    %620 = vrot.lane.b32.xlu0 %v618, 64
    %v621 = vpop.permute.xlu0 %620
    %v623 = vmul.f32 %v605, %v621
    %v624 = vpack.c.bf16 %v552, %v552
    %626 = vrot.lane.b32.xlu0 %v624, 32
    %v627 = vpop.permute.xlu0 %626
    %v629 = vsel %vm285, %v627, 0
    %631 = vmatpush.bf16.msra.mxu0 0
    %632 = vmatpush.bf16.msra.mxu0 0
    %633 = vmatpush.bf16.msra.mxu0 0
    %634 = vmatpush.bf16.msra.mxu0 0
    %635 = vmatpush.bf16.msra.mxu0 0
    %636 = vmatpush.bf16.msra.mxu0 0
    %637 = vmatpush.bf16.msra.mxu0 %v349
    %638 = vmatpush.bf16.msra.mxu0 %v348
    %639 = vmatmul.bf16.gmra.mxu0 %v629
    %v640 = vpop.f32.mrf.mxu0
    %v641 = vadd.f32 0.0, %v640
    %v642 = vpop.f32.mrf.mxu0
    %643 = vdwg.mxu0
    %v644 = vadd.f32 %v258, %v641
    %v645 = vxor.u32 %v644, 2147483648
    %v646 = vmul.f32 %v645, 1.442695
    %v647 = vpow.pop %v646
    %v648 = vadd.f32 %v647, 1.0
    %v649 = vrcp.pop %v648
    %v650 = vmul.f32 %v648, %v649
    %v651 = vsub.f32 1.0, %v650
    %v652 = vmul.f32 %v649, %v651
    %v653 = vadd.f32 %v649, %v652
    %vm654 = vweird.f32 %v648
    %vm655 = vweird.f32 %v649
    %vm656 = vmor %vm654, %vm655
    %v657 = vsel %vm656, %v649, %v653
    %v658 = vand.u32 2147483647, %v648
    %vm659 = vcmp.eq.f32.partialorder %v658, 8.507059e+37
    %v660 = vand.u32 %v648, 2147483648
    %v661 = vor.u32 1.1754944e-38, %v660
    %v662 = vsel %vm659, %v661, %v657
    %v663 = vmul.f32 1.0, %v662
    %v664 = vtanh.pop %v644
    %v665 = vmul.f32 %v663, %v553
    %667 = vrot.lane.b32.xlu0 %v664, 64
    %v668 = vpop.permute.xlu0 %667
    %v670 = vmul.f32 %v663, %v668
    %672 = vrot.lane.b32.xlu0 %v670, 32
    %v673 = vpop.permute.xlu0 %672
    %v675 = vadd.f32 %v665, %v673
    %v676 = vtanh.pop %v675
    %678 = vrot.lane.b32.xlu0 %v676, 64
    %v679 = vpop.permute.xlu0 %678
    %v681 = vmul.f32 %v663, %v679
    %682 = vset.pattern.permute.xlu0 0
    %683 = vperm.xlu0 %682, %v134
    %v684 = vpop.permute.xlu0 %683
    %vm685 = vcmp.eq.s32.totalorder %v684, 1
    %v686 = vsel %vm685, %v623, %v546
    %v687 = vsel %vm685, %v617, %v547
    %688 = vset.pattern.permute.xlu0 0
    %689 = vperm.xlu0 %688, %v137
    %v690 = vpop.permute.xlu0 %689
    %vm691 = vcmp.eq.s32.totalorder %v690, 1
    %v692 = vsel %vm691, %v681, %v552
    %v693 = vsel %vm691, %v675, %v553
    %695 = vrot.lane.b32.xlu0 %v686, 32
    %v696 = vpop.permute.xlu0 %695
    %s698 = scalar_lea.vmem [#allocation2], 16
    %699 = vst.msk [vmem:[%s698] sm:$0xff] %vm285, %v696
    %701 = vrot.lane.b32.xlu0 %v692, 32
    %v702 = vpop.permute.xlu0 %701
    %s704 = scalar_lea.vmem [#allocation3], 40
    %705 = vst.msk [vmem:[%s704] sm:$0xff] %vm285, %v702
    %v706 = vpack.c.bf16 %v686, %v686
    %708 = vrot.lane.b32.xlu0 %v706, 32
    %v709 = vpop.permute.xlu0 %708
    %v711 = vsel %vm285, %v709, 0
    %713 = vmatpush.bf16.msra.mxu0 0
    %714 = vmatpush.bf16.msra.mxu0 0
    %715 = vmatpush.bf16.msra.mxu0 0
    %716 = vmatpush.bf16.msra.mxu0 0
    %717 = vmatpush.bf16.msra.mxu0 0
    %718 = vmatpush.bf16.msra.mxu0 0
    %719 = vmatpush.bf16.msra.mxu0 %v282
    %720 = vmatpush.bf16.msra.mxu0 %v281
    %721 = vmatmul.bf16.gmra.mxu0 %v711
    %v722 = vpop.f32.mrf.mxu0
    %v723 = vadd.f32 0.0, %v722
    %v724 = vpop.f32.mrf.mxu0
    %725 = vdwg.mxu0
    %v726 = vadd.f32 %v224, %v723
    %v727 = vxor.u32 %v726, 2147483648
    %v728 = vmul.f32 %v727, 1.442695
    %v729 = vpow.pop %v728
    %v730 = vadd.f32 %v729, 1.0
    %v731 = vrcp.pop %v730
    %v732 = vmul.f32 %v730, %v731
    %v733 = vsub.f32 1.0, %v732
    %v734 = vmul.f32 %v731, %v733
    %v735 = vadd.f32 %v731, %v734
    %vm736 = vweird.f32 %v730
    %vm737 = vweird.f32 %v731
    %vm738 = vmor %vm736, %vm737
    %v739 = vsel %vm738, %v731, %v735
    %v740 = vand.u32 2147483647, %v730
    %vm741 = vcmp.eq.f32.partialorder %v740, 8.507059e+37
    %v742 = vand.u32 %v730, 2147483648
    %v743 = vor.u32 1.1754944e-38, %v742
    %v744 = vsel %vm741, %v743, %v739
    %v745 = vmul.f32 1.0, %v744
    %v746 = vtanh.pop %v726
    %v747 = vmul.f32 %v745, %v687
    %749 = vrot.lane.b32.xlu0 %v746, 64
    %v750 = vpop.permute.xlu0 %749
    %v752 = vmul.f32 %v745, %v750
    %754 = vrot.lane.b32.xlu0 %v752, 32
    %v755 = vpop.permute.xlu0 %754
    %v757 = vadd.f32 %v747, %v755
    %v758 = vtanh.pop %v757
    %760 = vrot.lane.b32.xlu0 %v758, 64
    %v761 = vpop.permute.xlu0 %760
    %v763 = vmul.f32 %v745, %v761
    %v764 = vpack.c.bf16 %v692, %v692
    %766 = vrot.lane.b32.xlu0 %v764, 32
    %v767 = vpop.permute.xlu0 %766
    %v769 = vsel %vm285, %v767, 0
    %771 = vmatpush.bf16.msra.mxu0 0
    %772 = vmatpush.bf16.msra.mxu0 0
    %773 = vmatpush.bf16.msra.mxu0 0
    %774 = vmatpush.bf16.msra.mxu0 0
    %775 = vmatpush.bf16.msra.mxu0 0
    %776 = vmatpush.bf16.msra.mxu0 0
    %777 = vmatpush.bf16.msra.mxu0 %v349
    %778 = vmatpush.bf16.msra.mxu0 %v348
    %779 = vmatmul.bf16.gmra.mxu0 %v769
    %v780 = vpop.f32.mrf.mxu0
    %v781 = vadd.f32 0.0, %v780
    %v782 = vpop.f32.mrf.mxu0
    %783 = vdwg.mxu0
    %v784 = vadd.f32 %v256, %v781
    %v785 = vxor.u32 %v784, 2147483648
    %v786 = vmul.f32 %v785, 1.442695
    %v787 = vpow.pop %v786
    %v788 = vadd.f32 %v787, 1.0
    %v789 = vrcp.pop %v788
    %v790 = vmul.f32 %v788, %v789
    %v791 = vsub.f32 1.0, %v790
    %v792 = vmul.f32 %v789, %v791
    %v793 = vadd.f32 %v789, %v792
    %vm794 = vweird.f32 %v788
    %vm795 = vweird.f32 %v789
    %vm796 = vmor %vm794, %vm795
    %v797 = vsel %vm796, %v789, %v793
    %v798 = vand.u32 2147483647, %v788
    %vm799 = vcmp.eq.f32.partialorder %v798, 8.507059e+37
    %v800 = vand.u32 %v788, 2147483648
    %v801 = vor.u32 1.1754944e-38, %v800
    %v802 = vsel %vm799, %v801, %v797
    %v803 = vmul.f32 1.0, %v802
    %v804 = vtanh.pop %v784
    %v805 = vmul.f32 %v803, %v693
    %807 = vrot.lane.b32.xlu0 %v804, 64
    %v808 = vpop.permute.xlu0 %807
    %v810 = vmul.f32 %v803, %v808
    %812 = vrot.lane.b32.xlu0 %v810, 32
    %v813 = vpop.permute.xlu0 %812
    %v815 = vadd.f32 %v805, %v813
    %v816 = vtanh.pop %v815
    %818 = vrot.lane.b32.xlu0 %v816, 64
    %v819 = vpop.permute.xlu0 %818
    %v821 = vmul.f32 %v803, %v819
    %822 = vset.pattern.permute.xlu0 0
    %823 = vperm.xlu0 %822, %v135
    %v824 = vpop.permute.xlu0 %823
    %vm825 = vcmp.eq.s32.totalorder %v824, 1
    %v826 = vsel %vm825, %v763, %v686
    %v827 = vsel %vm825, %v757, %v687
    %828 = vset.pattern.permute.xlu0 0
    %829 = vperm.xlu0 %828, %v136
    %v830 = vpop.permute.xlu0 %829
    %vm831 = vcmp.eq.s32.totalorder %v830, 1
    %v832 = vsel %vm831, %v821, %v692
    %v833 = vsel %vm831, %v815, %v693
    %835 = vrot.lane.b32.xlu0 %v826, 32
    %v836 = vpop.permute.xlu0 %835
    %s838 = scalar_lea.vmem [#allocation2], 24
    %839 = vst.msk [vmem:[%s838] sm:$0xff] %vm285, %v836
    %841 = vrot.lane.b32.xlu0 %v832, 32
    %v842 = vpop.permute.xlu0 %841
    %s844 = scalar_lea.vmem [#allocation3], 32
    %845 = vst.msk [vmem:[%s844] sm:$0xff] %vm285, %v842
    %v846 = vpack.c.bf16 %v826, %v826
    %848 = vrot.lane.b32.xlu0 %v846, 32
    %v849 = vpop.permute.xlu0 %848
    %v851 = vsel %vm285, %v849, 0
    %853 = vmatpush.bf16.msra.mxu0 0
    %854 = vmatpush.bf16.msra.mxu0 0
    %855 = vmatpush.bf16.msra.mxu0 0
    %856 = vmatpush.bf16.msra.mxu0 0
    %857 = vmatpush.bf16.msra.mxu0 0
    %858 = vmatpush.bf16.msra.mxu0 0
    %859 = vmatpush.bf16.msra.mxu0 %v282
    %860 = vmatpush.bf16.msra.mxu0 %v281
    %861 = vmatmul.bf16.gmra.mxu0 %v851
    %v862 = vpop.f32.mrf.mxu0
    %v863 = vadd.f32 0.0, %v862
    %v864 = vpop.f32.mrf.mxu0
    %865 = vdwg.mxu0
    %v866 = vadd.f32 %v227, %v863
    %v867 = vxor.u32 %v866, 2147483648
    %v868 = vmul.f32 %v867, 1.442695
    %v869 = vpow.pop %v868
    %v870 = vadd.f32 %v869, 1.0
    %v871 = vrcp.pop %v870
    %v872 = vmul.f32 %v870, %v871
    %v873 = vsub.f32 1.0, %v872
    %v874 = vmul.f32 %v871, %v873
    %v875 = vadd.f32 %v871, %v874
    %vm876 = vweird.f32 %v870
    %vm877 = vweird.f32 %v871
    %vm878 = vmor %vm876, %vm877
    %v879 = vsel %vm878, %v871, %v875
    %v880 = vand.u32 2147483647, %v870
    %vm881 = vcmp.eq.f32.partialorder %v880, 8.507059e+37
    %v882 = vand.u32 %v870, 2147483648
    %v883 = vor.u32 1.1754944e-38, %v882
    %v884 = vsel %vm881, %v883, %v879
    %v885 = vmul.f32 1.0, %v884
    %v886 = vtanh.pop %v866
    %v887 = vmul.f32 %v885, %v827
    %889 = vrot.lane.b32.xlu0 %v886, 64
    %v890 = vpop.permute.xlu0 %889
    %v892 = vmul.f32 %v885, %v890
    %894 = vrot.lane.b32.xlu0 %v892, 32
    %v895 = vpop.permute.xlu0 %894
    %v897 = vadd.f32 %v887, %v895
    %v898 = vtanh.pop %v897
    %900 = vrot.lane.b32.xlu0 %v898, 64
    %v901 = vpop.permute.xlu0 %900
    %v903 = vmul.f32 %v885, %v901
    %v904 = vpack.c.bf16 %v832, %v832
    %906 = vrot.lane.b32.xlu0 %v904, 32
    %v907 = vpop.permute.xlu0 %906
    %v909 = vsel %vm285, %v907, 0
    %911 = vmatpush.bf16.msra.mxu0 0
    %912 = vmatpush.bf16.msra.mxu0 0
    %913 = vmatpush.bf16.msra.mxu0 0
    %914 = vmatpush.bf16.msra.mxu0 0
    %915 = vmatpush.bf16.msra.mxu0 0
    %916 = vmatpush.bf16.msra.mxu0 0
    %917 = vmatpush.bf16.msra.mxu0 %v349
    %918 = vmatpush.bf16.msra.mxu0 %v348
    %919 = vmatmul.bf16.gmra.mxu0 %v909
    %v920 = vpop.f32.mrf.mxu0
    %v921 = vadd.f32 0.0, %v920
    %v922 = vpop.f32.mrf.mxu0
    %923 = vdwg.mxu0
    %v924 = vadd.f32 %v253, %v921
    %v925 = vxor.u32 %v924, 2147483648
    %v926 = vmul.f32 %v925, 1.442695
    %v927 = vpow.pop %v926
    %v928 = vadd.f32 %v927, 1.0
    %v929 = vrcp.pop %v928
    %v930 = vmul.f32 %v928, %v929
    %v931 = vsub.f32 1.0, %v930
    %v932 = vmul.f32 %v929, %v931
    %v933 = vadd.f32 %v929, %v932
    %vm934 = vweird.f32 %v928
    %vm935 = vweird.f32 %v929
    %vm936 = vmor %vm934, %vm935
    %v937 = vsel %vm936, %v929, %v933
    %v938 = vand.u32 2147483647, %v928
    %vm939 = vcmp.eq.f32.partialorder %v938, 8.507059e+37
    %v940 = vand.u32 %v928, 2147483648
    %v941 = vor.u32 1.1754944e-38, %v940
    %v942 = vsel %vm939, %v941, %v937
    %v943 = vmul.f32 1.0, %v942
    %v944 = vtanh.pop %v924
    %v945 = vmul.f32 %v943, %v833
    %947 = vrot.lane.b32.xlu0 %v944, 64
    %v948 = vpop.permute.xlu0 %947
    %v950 = vmul.f32 %v943, %v948
    %952 = vrot.lane.b32.xlu0 %v950, 32
    %v953 = vpop.permute.xlu0 %952
    %v955 = vadd.f32 %v945, %v953
    %v956 = vtanh.pop %v955
    %958 = vrot.lane.b32.xlu0 %v956, 64
    %v959 = vpop.permute.xlu0 %958
    %v961 = vmul.f32 %v943, %v959
    %v962 = vsel %vm831, %v903, %v826
    %v963 = vsel %vm831, %v897, %v827
    %v964 = vsel %vm825, %v961, %v832
    %v965 = vsel %vm825, %v955, %v833
    %967 = vrot.lane.b32.xlu0 %v962, 32
    %v968 = vpop.permute.xlu0 %967
    %s970 = scalar_lea.vmem [#allocation2], 32
    %971 = vst.msk [vmem:[%s970] sm:$0xff] %vm285, %v968
    %973 = vrot.lane.b32.xlu0 %v964, 32
    %v974 = vpop.permute.xlu0 %973
    %s976 = scalar_lea.vmem [#allocation3], 24
    %977 = vst.msk [vmem:[%s976] sm:$0xff] %vm285, %v974
    %v978 = vpack.c.bf16 %v962, %v962
    %980 = vrot.lane.b32.xlu0 %v978, 32
    %v981 = vpop.permute.xlu0 %980
    %v983 = vsel %vm285, %v981, 0
    %985 = vmatpush.bf16.msra.mxu0 0
    %986 = vmatpush.bf16.msra.mxu0 0
    %987 = vmatpush.bf16.msra.mxu0 0
    %988 = vmatpush.bf16.msra.mxu0 0
    %989 = vmatpush.bf16.msra.mxu0 0
    %990 = vmatpush.bf16.msra.mxu0 0
    %991 = vmatpush.bf16.msra.mxu0 %v282
    %992 = vmatpush.bf16.msra.mxu0 %v281
    %993 = vmatmul.bf16.gmra.mxu0 %v983
    %v994 = vpop.f32.mrf.mxu0
    %v995 = vadd.f32 0.0, %v994
    %v996 = vpop.f32.mrf.mxu0
    %997 = vdwg.mxu0
    %v998 = vadd.f32 %v229, %v995
    %v999 = vxor.u32 %v998, 2147483648
    %v1000 = vmul.f32 %v999, 1.442695
    %v1001 = vpow.pop %v1000
    %v1002 = vadd.f32 %v1001, 1.0
    %v1003 = vrcp.pop %v1002
    %v1004 = vmul.f32 %v1002, %v1003
    %v1005 = vsub.f32 1.0, %v1004
    %v1006 = vmul.f32 %v1003, %v1005
    %v1007 = vadd.f32 %v1003, %v1006
    %vm1008 = vweird.f32 %v1002
    %vm1009 = vweird.f32 %v1003
    %vm1010 = vmor %vm1008, %vm1009
    %v1011 = vsel %vm1010, %v1003, %v1007
    %v1012 = vand.u32 2147483647, %v1002
    %vm1013 = vcmp.eq.f32.partialorder %v1012, 8.507059e+37
    %v1014 = vand.u32 %v1002, 2147483648
    %v1015 = vor.u32 1.1754944e-38, %v1014
    %v1016 = vsel %vm1013, %v1015, %v1011
    %v1017 = vmul.f32 1.0, %v1016
    %v1018 = vtanh.pop %v998
    %v1019 = vmul.f32 %v1017, %v963
    %1021 = vrot.lane.b32.xlu0 %v1018, 64
    %v1022 = vpop.permute.xlu0 %1021
    %v1024 = vmul.f32 %v1017, %v1022
    %1026 = vrot.lane.b32.xlu0 %v1024, 32
    %v1027 = vpop.permute.xlu0 %1026
    %v1029 = vadd.f32 %v1019, %v1027
    %v1030 = vtanh.pop %v1029
    %1032 = vrot.lane.b32.xlu0 %v1030, 64
    %v1033 = vpop.permute.xlu0 %1032
    %v1035 = vmul.f32 %v1017, %v1033
    %v1036 = vpack.c.bf16 %v964, %v964
    %1038 = vrot.lane.b32.xlu0 %v1036, 32
    %v1039 = vpop.permute.xlu0 %1038
    %v1041 = vsel %vm285, %v1039, 0
    %1043 = vmatpush.bf16.msra.mxu0 0
    %1044 = vmatpush.bf16.msra.mxu0 0
    %1045 = vmatpush.bf16.msra.mxu0 0
    %1046 = vmatpush.bf16.msra.mxu0 0
    %1047 = vmatpush.bf16.msra.mxu0 0
    %1048 = vmatpush.bf16.msra.mxu0 0
    %1049 = vmatpush.bf16.msra.mxu0 %v349
    %1050 = vmatpush.bf16.msra.mxu0 %v348
    %1051 = vmatmul.bf16.gmra.mxu0 %v1041
    %v1052 = vpop.f32.mrf.mxu0
    %v1053 = vadd.f32 0.0, %v1052
    %v1054 = vpop.f32.mrf.mxu0
    %1055 = vdwg.mxu0
    %v1056 = vadd.f32 %v251, %v1053
    %v1057 = vxor.u32 %v1056, 2147483648
    %v1058 = vmul.f32 %v1057, 1.442695
    %v1059 = vpow.pop %v1058
    %v1060 = vadd.f32 %v1059, 1.0
    %v1061 = vrcp.pop %v1060
    %v1062 = vmul.f32 %v1060, %v1061
    %v1063 = vsub.f32 1.0, %v1062
    %v1064 = vmul.f32 %v1061, %v1063
    %v1065 = vadd.f32 %v1061, %v1064
    %vm1066 = vweird.f32 %v1060
    %vm1067 = vweird.f32 %v1061
    %vm1068 = vmor %vm1066, %vm1067
    %v1069 = vsel %vm1068, %v1061, %v1065
    %v1070 = vand.u32 2147483647, %v1060
    %vm1071 = vcmp.eq.f32.partialorder %v1070, 8.507059e+37
    %v1072 = vand.u32 %v1060, 2147483648
    %v1073 = vor.u32 1.1754944e-38, %v1072
    %v1074 = vsel %vm1071, %v1073, %v1069
    %v1075 = vmul.f32 1.0, %v1074
    %v1076 = vtanh.pop %v1056
    %v1077 = vmul.f32 %v1075, %v965
    %1079 = vrot.lane.b32.xlu0 %v1076, 64
    %v1080 = vpop.permute.xlu0 %1079
    %v1082 = vmul.f32 %v1075, %v1080
    %1084 = vrot.lane.b32.xlu0 %v1082, 32
    %v1085 = vpop.permute.xlu0 %1084
    %v1087 = vadd.f32 %v1077, %v1085
    %v1088 = vtanh.pop %v1087
    %1090 = vrot.lane.b32.xlu0 %v1088, 64
    %v1091 = vpop.permute.xlu0 %1090
    %v1093 = vmul.f32 %v1075, %v1091
    %v1094 = vsel %vm691, %v1035, %v962
    %v1095 = vsel %vm691, %v1029, %v963
    %v1096 = vsel %vm685, %v1093, %v964
    %v1097 = vsel %vm685, %v1087, %v965
    %1099 = vrot.lane.b32.xlu0 %v1094, 32
    %v1100 = vpop.permute.xlu0 %1099
    %s1102 = scalar_lea.vmem [#allocation2], 40
    %1103 = vst.msk [vmem:[%s1102] sm:$0xff] %vm285, %v1100
    %1105 = vrot.lane.b32.xlu0 %v1096, 32
    %v1106 = vpop.permute.xlu0 %1105
    %s1108 = scalar_lea.vmem [#allocation3], 16
    %1109 = vst.msk [vmem:[%s1108] sm:$0xff] %vm285, %v1106
    %v1110 = vpack.c.bf16 %v1094, %v1094
    %1112 = vrot.lane.b32.xlu0 %v1110, 32
    %v1113 = vpop.permute.xlu0 %1112
    %v1115 = vsel %vm285, %v1113, 0
    %1117 = vmatpush.bf16.msra.mxu0 0
    %1118 = vmatpush.bf16.msra.mxu0 0
    %1119 = vmatpush.bf16.msra.mxu0 0
    %1120 = vmatpush.bf16.msra.mxu0 0
    %1121 = vmatpush.bf16.msra.mxu0 0
    %1122 = vmatpush.bf16.msra.mxu0 0
    %1123 = vmatpush.bf16.msra.mxu0 %v282
    %1124 = vmatpush.bf16.msra.mxu0 %v281
    %1125 = vmatmul.bf16.gmra.mxu0 %v1115
    %v1126 = vpop.f32.mrf.mxu0
    %v1127 = vadd.f32 0.0, %v1126
    %v1128 = vpop.f32.mrf.mxu0
    %1129 = vdwg.mxu0
    %v1130 = vadd.f32 %v232, %v1127
    %v1131 = vxor.u32 %v1130, 2147483648
    %v1132 = vmul.f32 %v1131, 1.442695
    %v1133 = vpow.pop %v1132
    %v1134 = vadd.f32 %v1133, 1.0
    %v1135 = vrcp.pop %v1134
    %v1136 = vmul.f32 %v1134, %v1135
    %v1137 = vsub.f32 1.0, %v1136
    %v1138 = vmul.f32 %v1135, %v1137
    %v1139 = vadd.f32 %v1135, %v1138
    %vm1140 = vweird.f32 %v1134
    %vm1141 = vweird.f32 %v1135
    %vm1142 = vmor %vm1140, %vm1141
    %v1143 = vsel %vm1142, %v1135, %v1139
    %v1144 = vand.u32 2147483647, %v1134
    %vm1145 = vcmp.eq.f32.partialorder %v1144, 8.507059e+37
    %v1146 = vand.u32 %v1134, 2147483648
    %v1147 = vor.u32 1.1754944e-38, %v1146
    %v1148 = vsel %vm1145, %v1147, %v1143
    %v1149 = vmul.f32 1.0, %v1148
    %v1150 = vtanh.pop %v1130
    %v1151 = vmul.f32 %v1149, %v1095
    %1153 = vrot.lane.b32.xlu0 %v1150, 64
    %v1154 = vpop.permute.xlu0 %1153
    %v1156 = vmul.f32 %v1149, %v1154
    %1158 = vrot.lane.b32.xlu0 %v1156, 32
    %v1159 = vpop.permute.xlu0 %1158
    %v1161 = vadd.f32 %v1151, %v1159
    %v1162 = vtanh.pop %v1161
    %1164 = vrot.lane.b32.xlu0 %v1162, 64
    %v1165 = vpop.permute.xlu0 %1164
    %v1167 = vmul.f32 %v1149, %v1165
    %v1168 = vpack.c.bf16 %v1096, %v1096
    %1170 = vrot.lane.b32.xlu0 %v1168, 32
    %v1171 = vpop.permute.xlu0 %1170
    %v1173 = vsel %vm285, %v1171, 0
    %1175 = vmatpush.bf16.msra.mxu0 0
    %1176 = vmatpush.bf16.msra.mxu0 0
    %1177 = vmatpush.bf16.msra.mxu0 0
    %1178 = vmatpush.bf16.msra.mxu0 0
    %1179 = vmatpush.bf16.msra.mxu0 0
    %1180 = vmatpush.bf16.msra.mxu0 0
    %1181 = vmatpush.bf16.msra.mxu0 %v349
    %1182 = vmatpush.bf16.msra.mxu0 %v348
    %1183 = vmatmul.bf16.gmra.mxu0 %v1173
    %v1184 = vpop.f32.mrf.mxu0
    %v1185 = vadd.f32 0.0, %v1184
    %v1186 = vpop.f32.mrf.mxu0
    %1187 = vdwg.mxu0
    %v1188 = vadd.f32 %v248, %v1185
    %v1189 = vxor.u32 %v1188, 2147483648
    %v1190 = vmul.f32 %v1189, 1.442695
    %v1191 = vpow.pop %v1190
    %v1192 = vadd.f32 %v1191, 1.0
    %v1193 = vrcp.pop %v1192
    %v1194 = vmul.f32 %v1192, %v1193
    %v1195 = vsub.f32 1.0, %v1194
    %v1196 = vmul.f32 %v1193, %v1195
    %v1197 = vadd.f32 %v1193, %v1196
    %vm1198 = vweird.f32 %v1192
    %vm1199 = vweird.f32 %v1193
    %vm1200 = vmor %vm1198, %vm1199
    %v1201 = vsel %vm1200, %v1193, %v1197
    %v1202 = vand.u32 2147483647, %v1192
    %vm1203 = vcmp.eq.f32.partialorder %v1202, 8.507059e+37
    %v1204 = vand.u32 %v1192, 2147483648
    %v1205 = vor.u32 1.1754944e-38, %v1204
    %v1206 = vsel %vm1203, %v1205, %v1201
    %v1207 = vmul.f32 1.0, %v1206
    %v1208 = vtanh.pop %v1188
    %v1209 = vmul.f32 %v1207, %v1097
    %1211 = vrot.lane.b32.xlu0 %v1208, 64
    %v1212 = vpop.permute.xlu0 %1211
    %v1214 = vmul.f32 %v1207, %v1212
    %1216 = vrot.lane.b32.xlu0 %v1214, 32
    %v1217 = vpop.permute.xlu0 %1216
    %v1219 = vadd.f32 %v1209, %v1217
    %v1220 = vtanh.pop %v1219
    %1222 = vrot.lane.b32.xlu0 %v1220, 64
    %v1223 = vpop.permute.xlu0 %1222
    %v1225 = vmul.f32 %v1207, %v1223
    %v1226 = vsel %vm551, %v1167, %v1094
    %v1227 = vsel %vm551, %v1161, %v1095
    %v1228 = vsel %vm545, %v1225, %v1096
    %v1229 = vsel %vm545, %v1219, %v1097
    %1231 = vrot.lane.b32.xlu0 %v1226, 32
    %v1232 = vpop.permute.xlu0 %1231
    %s1234 = scalar_lea.vmem [#allocation2], 48
    %1235 = vst.msk [vmem:[%s1234] sm:$0xff] %vm285, %v1232
    %1237 = vrot.lane.b32.xlu0 %v1228, 32
    %v1238 = vpop.permute.xlu0 %1237
    %s1240 = scalar_lea.vmem [#allocation3], 8
    %1241 = vst.msk [vmem:[%s1240] sm:$0xff] %vm285, %v1238
    %v1242 = vpack.c.bf16 %v1226, %v1226
    %1244 = vrot.lane.b32.xlu0 %v1242, 32
    %v1245 = vpop.permute.xlu0 %1244
    %v1247 = vsel %vm285, %v1245, 0
    %1249 = vmatpush.bf16.msra.mxu0 0
    %1250 = vmatpush.bf16.msra.mxu0 0
    %1251 = vmatpush.bf16.msra.mxu0 0
    %1252 = vmatpush.bf16.msra.mxu0 0
    %1253 = vmatpush.bf16.msra.mxu0 0
    %1254 = vmatpush.bf16.msra.mxu0 0
    %1255 = vmatpush.bf16.msra.mxu0 %v282
    %1256 = vmatpush.bf16.msra.mxu0 %v281
    %1257 = vmatmul.bf16.gmra.mxu0 %v1247
    %v1258 = vpop.f32.mrf.mxu0
    %v1259 = vadd.f32 0.0, %v1258
    %v1260 = vpop.f32.mrf.mxu0
    %1261 = vdwg.mxu0
    %v1262 = vadd.f32 %v234, %v1259
    %v1263 = vxor.u32 %v1262, 2147483648
    %v1264 = vmul.f32 %v1263, 1.442695
    %v1265 = vpow.pop %v1264
    %v1266 = vadd.f32 %v1265, 1.0
    %v1267 = vrcp.pop %v1266
    %v1268 = vmul.f32 %v1266, %v1267
    %v1269 = vsub.f32 1.0, %v1268
    %v1270 = vmul.f32 %v1267, %v1269
    %v1271 = vadd.f32 %v1267, %v1270
    %vm1272 = vweird.f32 %v1266
    %vm1273 = vweird.f32 %v1267
    %vm1274 = vmor %vm1272, %vm1273
    %v1275 = vsel %vm1274, %v1267, %v1271
    %v1276 = vand.u32 2147483647, %v1266
    %vm1277 = vcmp.eq.f32.partialorder %v1276, 8.507059e+37
    %v1278 = vand.u32 %v1266, 2147483648
    %v1279 = vor.u32 1.1754944e-38, %v1278
    %v1280 = vsel %vm1277, %v1279, %v1275
    %v1281 = vmul.f32 1.0, %v1280
    %v1282 = vtanh.pop %v1262
    %v1283 = vmul.f32 %v1281, %v1227
    %1285 = vrot.lane.b32.xlu0 %v1282, 64
    %v1286 = vpop.permute.xlu0 %1285
    %v1288 = vmul.f32 %v1281, %v1286
    %1290 = vrot.lane.b32.xlu0 %v1288, 32
    %v1291 = vpop.permute.xlu0 %1290
    %v1293 = vadd.f32 %v1283, %v1291
    %v1294 = vtanh.pop %v1293
    %1296 = vrot.lane.b32.xlu0 %v1294, 64
    %v1297 = vpop.permute.xlu0 %1296
    %v1299 = vmul.f32 %v1281, %v1297
    %v1300 = vpack.c.bf16 %v1228, %v1228
    %1302 = vrot.lane.b32.xlu0 %v1300, 32
    %v1303 = vpop.permute.xlu0 %1302
    %v1305 = vsel %vm285, %v1303, 0
    %1307 = vmatpush.bf16.msra.mxu0 0
    %1308 = vmatpush.bf16.msra.mxu0 0
    %1309 = vmatpush.bf16.msra.mxu0 0
    %1310 = vmatpush.bf16.msra.mxu0 0
    %1311 = vmatpush.bf16.msra.mxu0 0
    %1312 = vmatpush.bf16.msra.mxu0 0
    %1313 = vmatpush.bf16.msra.mxu0 %v349
    %1314 = vmatpush.bf16.msra.mxu0 %v348
    %1315 = vmatmul.bf16.gmra.mxu0 %v1305
    %v1316 = vpop.f32.mrf.mxu0
    %v1317 = vadd.f32 0.0, %v1316
    %v1318 = vpop.f32.mrf.mxu0
    %1319 = vdwg.mxu0
    %v1320 = vadd.f32 %v246, %v1317
    %v1321 = vxor.u32 %v1320, 2147483648
    %v1322 = vmul.f32 %v1321, 1.442695
    %v1323 = vpow.pop %v1322
    %v1324 = vadd.f32 %v1323, 1.0
    %v1325 = vrcp.pop %v1324
    %v1326 = vmul.f32 %v1324, %v1325
    %v1327 = vsub.f32 1.0, %v1326
    %v1328 = vmul.f32 %v1325, %v1327
    %v1329 = vadd.f32 %v1325, %v1328
    %vm1330 = vweird.f32 %v1324
    %vm1331 = vweird.f32 %v1325
    %vm1332 = vmor %vm1330, %vm1331
    %v1333 = vsel %vm1332, %v1325, %v1329
    %v1334 = vand.u32 2147483647, %v1324
    %vm1335 = vcmp.eq.f32.partialorder %v1334, 8.507059e+37
    %v1336 = vand.u32 %v1324, 2147483648
    %v1337 = vor.u32 1.1754944e-38, %v1336
    %v1338 = vsel %vm1335, %v1337, %v1333
    %v1339 = vmul.f32 1.0, %v1338
    %v1340 = vtanh.pop %v1320
    %v1341 = vmul.f32 %v1339, %v1229
    %1343 = vrot.lane.b32.xlu0 %v1340, 64
    %v1344 = vpop.permute.xlu0 %1343
    %v1346 = vmul.f32 %v1339, %v1344
    %1348 = vrot.lane.b32.xlu0 %v1346, 32
    %v1349 = vpop.permute.xlu0 %1348
    %v1351 = vadd.f32 %v1341, %v1349
    %v1352 = vtanh.pop %v1351
    %1354 = vrot.lane.b32.xlu0 %v1352, 64
    %v1355 = vpop.permute.xlu0 %1354
    %v1357 = vmul.f32 %v1339, %v1355
    %v1358 = vsel %vm412, %v1299, %v1226
    %v1359 = vsel %vm406, %v1357, %v1228
    %1361 = vrot.lane.b32.xlu0 %v1358, 32
    %v1362 = vpop.permute.xlu0 %1361
    %s1364 = scalar_lea.vmem [#allocation2], 56
    %1365 = vst.msk [vmem:[%s1364] sm:$0xff] %vm285, %v1362
    %1367 = vrot.lane.b32.xlu0 %v1359, 32
    %v1368 = vpop.permute.xlu0 %1367
    %1370 = vst.msk [vmem:[#allocation3] sm:$0xff] %vm285, %v1368
    %v1371 = vld [vmem:[#allocation2] sm:$0xff]
    %v1372 = vld [vmem:[#allocation2 + $0x8] sm:$0xff]
    %v1373 = vld [vmem:[#allocation2 + $0x10] sm:$0xff]
    %v1374 = vld [vmem:[#allocation2 + $0x18] sm:$0xff]
    %v1375 = vld [vmem:[#allocation2 + $0x20] sm:$0xff]
    %v1376 = vld [vmem:[#allocation2 + $0x28] sm:$0xff]
    %v1377 = vld [vmem:[#allocation2 + $0x30] sm:$0xff]
    %v1378 = vld [vmem:[#allocation2 + $0x38] sm:$0xff]
    %v1379 = vld [vmem:[#allocation3] sm:$0xff]
    %v1380 = vld [vmem:[#allocation3 + $0x8] sm:$0xff]
    %v1381 = vld [vmem:[#allocation3 + $0x10] sm:$0xff]
    %v1382 = vld [vmem:[#allocation3 + $0x18] sm:$0xff]
    %v1383 = vld [vmem:[#allocation3 + $0x20] sm:$0xff]
    %v1384 = vld [vmem:[#allocation3 + $0x28] sm:$0xff]
    %v1385 = vld [vmem:[#allocation3 + $0x30] sm:$0xff]
    %v1386 = vld [vmem:[#allocation3 + $0x38] sm:$0xff]
    %1395 = vrot.lane.b32.xlu0 %v1379, 32
    %v1396 = vpop.permute.xlu0 %1395
    %1397 = vrot.lane.b32.xlu0 %v1380, 32
    %v1398 = vpop.permute.xlu0 %1397
    %1399 = vrot.lane.b32.xlu0 %v1381, 32
    %v1400 = vpop.permute.xlu0 %1399
    %1401 = vrot.lane.b32.xlu0 %v1382, 32
    %v1402 = vpop.permute.xlu0 %1401
    %1403 = vrot.lane.b32.xlu0 %v1383, 32
    %v1404 = vpop.permute.xlu0 %1403
    %1405 = vrot.lane.b32.xlu0 %v1384, 32
    %v1406 = vpop.permute.xlu0 %1405
    %1407 = vrot.lane.b32.xlu0 %v1385, 32
    %v1408 = vpop.permute.xlu0 %1407
    %1409 = vrot.lane.b32.xlu0 %v1386, 32
    %v1410 = vpop.permute.xlu0 %1409
    %v1419 = vsel %vm285, %v1371, %v1396
    %v1420 = vsel %vm285, %v1372, %v1398
    %v1421 = vsel %vm285, %v1373, %v1400
    %v1422 = vsel %vm285, %v1374, %v1402
    %v1423 = vsel %vm285, %v1375, %v1404
    %v1424 = vsel %vm285, %v1376, %v1406
    %v1425 = vsel %vm285, %v1377, %v1408
    %v1426 = vsel %vm285, %v1378, %v1410
    %1428 = vset.pattern.permute.xlu0 0
    %1429 = vperm.xlu0 %1428, %v140
    %v1430 = vpop.permute.xlu0 %1429
    %1433 = vset.pattern.permute.xlu0 0
    %1434 = vperm.xlu0 %1433, %v141
    %v1435 = vpop.permute.xlu0 %1434
    %1438 = vset.pattern.permute.xlu0 0
    %1439 = vperm.xlu0 %1438, %v142
    %v1440 = vpop.permute.xlu0 %1439
    %1443 = vset.pattern.permute.xlu0 0
    %1444 = vperm.xlu0 %1443, %v143
    %v1445 = vpop.permute.xlu0 %1444
    %1448 = vset.pattern.permute.xlu0 0
    %1449 = vperm.xlu0 %1448, %v144
    %v1450 = vpop.permute.xlu0 %1449
    %1453 = vset.pattern.permute.xlu0 0
    %1454 = vperm.xlu0 %1453, %v145
    %v1455 = vpop.permute.xlu0 %1454
    %1458 = vset.pattern.permute.xlu0 0
    %1459 = vperm.xlu0 %1458, %v146
    %v1460 = vpop.permute.xlu0 %1459
    %1463 = vset.pattern.permute.xlu0 0
    %1464 = vperm.xlu0 %1463, %v147
    %v1465 = vpop.permute.xlu0 %1464
    %v1467 = vmul.f32 %v1419, %v1430
    %v1468 = vmul.f32 %v1420, %v1435
    %v1469 = vmul.f32 %v1421, %v1440
    %v1470 = vmul.f32 %v1422, %v1445
    %v1471 = vmul.f32 %v1423, %v1450
    %v1472 = vmul.f32 %v1424, %v1455
    %v1473 = vmul.f32 %v1425, %v1460
    %v1474 = vmul.f32 %v1426, %v1465
    %v1475 = vpack.c.bf16 %v1468, %v1467
    %v1476 = vpack.c.bf16 %v1470, %v1469
    %v1477 = vpack.c.bf16 %v1472, %v1471
    %v1478 = vpack.c.bf16 %v1474, %v1473
    %v1479 = vld [vmem:[#allocation9] sm:$0xf]
    %v1480 = vld [vmem:[#allocation9 + $0x4] sm:$0xf]
    %v1481 = vld [vmem:[#allocation9 + $0x8] sm:$0xf]
    %v1482 = vld [vmem:[#allocation9 + $0xc] sm:$0xf]
    %v1483 = vld [vmem:[#allocation9 + $0x10] sm:$0xf]
    %v1484 = vld [vmem:[#allocation9 + $0x14] sm:$0xf]
    %v1485 = vld [vmem:[#allocation9 + $0x18] sm:$0xf]
    %v1486 = vld [vmem:[#allocation9 + $0x1c] sm:$0xf]
    %v1487 = vld [vmem:[%s7] sm:$0x1]
    %v1489 = vperm.slane %v1487, 0
    %v1499 = vunpack.c.l.b16 %v1479
    %v1500 = vunpack.c.l.b16 %v1480
    %v1501 = vunpack.c.l.b16 %v1481
    %v1502 = vunpack.c.l.b16 %v1482
    %v1503 = vunpack.c.l.b16 %v1483
    %v1504 = vunpack.c.l.b16 %v1484
    %v1505 = vunpack.c.l.b16 %v1485
    %v1506 = vunpack.c.l.b16 %v1486
    %v1507 = vpack.c.b16 %v1500, %v1499
    %v1508 = vpack.c.b16 %v1502, %v1501
    %v1509 = vpack.c.b16 %v1504, %v1503
    %v1510 = vpack.c.b16 %v1506, %v1505
    %vm1515 = vcmask 523264
    %v1517 = vsel %vm1515, %v1475, 0
    %v1520 = vsel %vm1515, %v1476, 0
    %v1523 = vsel %vm1515, %v1477, 0
    %v1526 = vsel %vm1515, %v1478, 0
    %1528 = vmatpush.bf16.msra.mxu0 0
    %1529 = vmatpush.bf16.msra.mxu0 0
    %1530 = vmatpush.bf16.msra.mxu0 0
    %1531 = vmatpush.bf16.msra.mxu0 0
    %1532 = vmatpush.bf16.msra.mxu0 %v1510
    %1533 = vmatpush.bf16.msra.mxu0 %v1509
    %1534 = vmatpush.bf16.msra.mxu0 %v1508
    %1535 = vmatpush.bf16.msra.mxu0 %v1507
    %1536 = vmatmul.bf16.gmra.mxu0 %v1517
    %v1537 = vpop.f32.mrf.mxu0
    %v1538 = vadd.f32 %v1489, %v1537
    %v1539 = vpop.f32.mrf.mxu0
    %v1540 = vadd.f32 %v1489, %v1539
    %1541 = vmatmul.bf16.gmra.mxu0 %v1520
    %v1542 = vpop.f32.mrf.mxu0
    %v1543 = vadd.f32 %v1489, %v1542
    %v1544 = vpop.f32.mrf.mxu0
    %v1545 = vadd.f32 %v1489, %v1544
    %1546 = vmatmul.bf16.gmra.mxu0 %v1523
    %v1547 = vpop.f32.mrf.mxu0
    %v1548 = vadd.f32 %v1489, %v1547
    %v1549 = vpop.f32.mrf.mxu0
    %v1550 = vadd.f32 %v1489, %v1549
    %1551 = vmatmul.bf16.gmra.mxu0 %v1526
    %v1552 = vpop.f32.mrf.mxu0
    %v1553 = vadd.f32 %v1489, %v1552
    %v1554 = vpop.f32.mrf.mxu0
    %v1555 = vadd.f32 %v1489, %v1554
    %1556 = vdwg.mxu0
    %v1557 = vtanh.pop %v1538
    %v1558 = vtanh.pop %v1540
    %v1559 = vtanh.pop %v1543
    %v1560 = vtanh.pop %v1545
    %v1561 = vtanh.pop %v1548
    %v1562 = vtanh.pop %v1550
    %v1563 = vtanh.pop %v1553
    %v1564 = vtanh.pop %v1555
    %v1565 = vld [vmem:[%s8] sm:$0x1]
    %v1567 = vperm.slane %v1565, 0
    %v1569 = vmul.f32 %v1557, %v1567
    %v1570 = vmul.f32 %v1558, %v1567
    %v1571 = vmul.f32 %v1559, %v1567
    %v1572 = vmul.f32 %v1560, %v1567
    %v1573 = vmul.f32 %v1561, %v1567
    %v1574 = vmul.f32 %v1562, %v1567
    %v1575 = vmul.f32 %v1563, %v1567
    %v1576 = vmul.f32 %v1564, %v1567
    %v1577 = vsel %vm1515, %v1569, 0.0
    %1578 = vadd.xlane.f32.xlu0 %v1577
    %v1579 = vpop.xlane.xlu0 %1578
    %v1580 = vsel %vm1515, %v1570, 0.0
    %1581 = vadd.xlane.f32.xlu0 %v1580
    %v1582 = vpop.xlane.xlu0 %1581
    %v1583 = vsel %vm1515, %v1571, 0.0
    %1584 = vadd.xlane.f32.xlu0 %v1583
    %v1585 = vpop.xlane.xlu0 %1584
    %v1586 = vsel %vm1515, %v1572, 0.0
    %1587 = vadd.xlane.f32.xlu0 %v1586
    %v1588 = vpop.xlane.xlu0 %1587
    %v1589 = vsel %vm1515, %v1573, 0.0
    %1590 = vadd.xlane.f32.xlu0 %v1589
    %v1591 = vpop.xlane.xlu0 %1590
    %v1592 = vsel %vm1515, %v1574, 0.0
    %1593 = vadd.xlane.f32.xlu0 %v1592
    %v1594 = vpop.xlane.xlu0 %1593
    %v1595 = vsel %vm1515, %v1575, 0.0
    %1596 = vadd.xlane.f32.xlu0 %v1595
    %v1597 = vpop.xlane.xlu0 %1596
    %v1598 = vsel %vm1515, %v1576, 0.0
    %1599 = vadd.xlane.f32.xlu0 %v1598
    %v1600 = vpop.xlane.xlu0 %1599
    %v1601 = vmax.f32 %v1579, %v1591
    %v1602 = vmax.f32 %v1582, %v1594
    %v1603 = vmax.f32 %v1585, %v1597
    %v1604 = vmax.f32 %v1588, %v1600
    %v1605 = vmax.f32 %v1601, %v1602
    %v1606 = vmax.f32 %v1603, %v1604
    %v1607 = vmax.f32 %v1605, %v1606
    %v1608 = vsub.f32 %v1579, %v1607
    %v1609 = vsub.f32 %v1582, %v1607
    %v1610 = vsub.f32 %v1585, %v1607
    %v1611 = vsub.f32 %v1588, %v1607
    %v1612 = vsub.f32 %v1591, %v1607
    %v1613 = vsub.f32 %v1594, %v1607
    %v1614 = vsub.f32 %v1597, %v1607
    %v1615 = vsub.f32 %v1600, %v1607
    %v1616 = vmul.f32 %v1608, 1.442695
    %v1617 = vpow.pop %v1616
    %v1618 = vmul.f32 %v1609, 1.442695
    %v1619 = vpow.pop %v1618
    %v1620 = vmul.f32 %v1610, 1.442695
    %v1621 = vpow.pop %v1620
    %v1622 = vmul.f32 %v1611, 1.442695
    %v1623 = vpow.pop %v1622
    %v1624 = vmul.f32 %v1612, 1.442695
    %v1625 = vpow.pop %v1624
    %v1626 = vmul.f32 %v1613, 1.442695
    %v1627 = vpow.pop %v1626
    %v1628 = vmul.f32 %v1614, 1.442695
    %v1629 = vpow.pop %v1628
    %v1630 = vmul.f32 %v1615, 1.442695
    %v1631 = vpow.pop %v1630
    %v1632 = vadd.f32 %v1617, %v1619
    %v1633 = vadd.f32 %v1632, %v1621
    %v1634 = vadd.f32 %v1633, %v1623
    %v1635 = vadd.f32 %v1634, %v1625
    %v1636 = vadd.f32 %v1635, %v1627
    %v1637 = vadd.f32 %v1636, %v1629
    %v1638 = vadd.f32 %v1637, %v1631
    %v1639 = vrcp.pop %v1638
    %v1640 = vmul.f32 %v1617, %v1639
    %v1641 = vmul.f32 %v1619, %v1639
    %v1642 = vmul.f32 %v1621, %v1639
    %v1643 = vmul.f32 %v1623, %v1639
    %v1644 = vmul.f32 %v1625, %v1639
    %v1645 = vmul.f32 %v1627, %v1639
    %v1646 = vmul.f32 %v1629, %v1639
    %v1647 = vmul.f32 %v1631, %v1639
    %v1648 = vmul.f32 %v1467, %v1640
    %v1649 = vmul.f32 %v1468, %v1641
    %v1650 = vmul.f32 %v1469, %v1642
    %v1651 = vmul.f32 %v1470, %v1643
    %v1652 = vmul.f32 %v1471, %v1644
    %v1653 = vmul.f32 %v1472, %v1645
    %v1654 = vmul.f32 %v1473, %v1646
    %v1655 = vmul.f32 %v1474, %v1647
    %v1656 = vsel %vm1515, %v1648, 0.0
    %v1657 = vsel %vm1515, %v1649, 0.0
    %v1658 = vadd.f32 %v1656, %v1657
    %v1659 = vsel %vm1515, %v1650, 0.0
    %v1660 = vadd.f32 %v1658, %v1659
    %v1661 = vsel %vm1515, %v1651, 0.0
    %v1662 = vadd.f32 %v1660, %v1661
    %v1663 = vsel %vm1515, %v1652, 0.0
    %v1664 = vadd.f32 %v1662, %v1663
    %v1665 = vsel %vm1515, %v1653, 0.0
    %v1666 = vadd.f32 %v1664, %v1665
    %v1667 = vsel %vm1515, %v1654, 0.0
    %v1668 = vadd.f32 %v1666, %v1667
    %v1669 = vsel %vm1515, %v1655, 0.0
    %v1670 = vadd.f32 %v1668, %v1669
    %v1671 = vpack.c.bf16 %v1670, %v1670
    %v1672 = vld [vmem:[#allocation11] sm:$0xf]
    %v1673 = vld [vmem:[#allocation11 + $0x4] sm:$0xf]
    %v1674 = vld [vmem:[#allocation11 + $0x8] sm:$0xf]
    %v1675 = vld [vmem:[#allocation11 + $0xc] sm:$0xf]
    %v1676 = vld [vmem:[#allocation11 + $0x10] sm:$0xf]
    %v1677 = vld [vmem:[#allocation11 + $0x14] sm:$0xf]
    %v1678 = vld [vmem:[#allocation11 + $0x18] sm:$0xf]
    %v1679 = vld [vmem:[#allocation11 + $0x1c] sm:$0xf]
    %v1680 = vld [vmem:[%s10] sm:$0x1]
    %v1682 = vperm.slane %v1680, 0
    %v1692 = vunpack.c.l.b16 %v1672
    %v1693 = vunpack.c.l.b16 %v1673
    %v1694 = vunpack.c.l.b16 %v1674
    %v1695 = vunpack.c.l.b16 %v1675
    %v1696 = vunpack.c.l.b16 %v1676
    %v1697 = vunpack.c.l.b16 %v1677
    %v1698 = vunpack.c.l.b16 %v1678
    %v1699 = vunpack.c.l.b16 %v1679
    %v1700 = vpack.c.b16 %v1693, %v1692
    %v1701 = vpack.c.b16 %v1695, %v1694
    %v1702 = vpack.c.b16 %v1697, %v1696
    %v1703 = vpack.c.b16 %v1699, %v1698
    %v1709 = vsel %vm1515, %v1671, 0
    %1711 = vmatpush.bf16.msra.mxu0 0
    %1712 = vmatpush.bf16.msra.mxu0 0
    %1713 = vmatpush.bf16.msra.mxu0 0
    %1714 = vmatpush.bf16.msra.mxu0 0
    %1715 = vmatpush.bf16.msra.mxu0 %v1703
    %1716 = vmatpush.bf16.msra.mxu0 %v1702
    %1717 = vmatpush.bf16.msra.mxu0 %v1701
    %1718 = vmatpush.bf16.msra.mxu0 %v1700
    %1719 = vmatmul.bf16.gmra.mxu0 %v1709
    %v1720 = vpop.f32.mrf.mxu0
    %v1721 = vadd.f32 %v1682, %v1720
    %v1722 = vpop.f32.mrf.mxu0
    %1723 = vdwg.mxu0
    %v1724 = vmax.f32 %v1721, 0.0
    %v1725 = vpack.c.bf16 %v1724, %v1724
    %v1726 = vld [vmem:[%s11] sm:$0xf]
    %v1727 = vld [vmem:[%s11 + $0x4] sm:$0xf]
    %v1728 = vld [vmem:[%s11 + $0x8] sm:$0xf]
    %v1729 = vld [vmem:[%s11 + $0xc] sm:$0xf]
    %v1730 = vld [vmem:[%s11 + $0x10] sm:$0xf]
    %v1731 = vld [vmem:[%s11 + $0x14] sm:$0xf]
    %v1732 = vld [vmem:[%s11 + $0x18] sm:$0xf]
    %v1733 = vld [vmem:[%s11 + $0x1c] sm:$0xf]
    %v1734 = vld [vmem:[%s12] sm:$0x1]
    %v1736 = vperm.slane %v1734, 0
    %v1746 = vunpack.c.l.b16 %v1726
    %v1747 = vunpack.c.l.b16 %v1727
    %v1748 = vunpack.c.l.b16 %v1728
    %v1749 = vunpack.c.l.b16 %v1729
    %v1750 = vunpack.c.l.b16 %v1730
    %v1751 = vunpack.c.l.b16 %v1731
    %v1752 = vunpack.c.l.b16 %v1732
    %v1753 = vunpack.c.l.b16 %v1733
    %v1754 = vpack.c.b16 %v1747, %v1746
    %v1755 = vpack.c.b16 %v1749, %v1748
    %v1756 = vpack.c.b16 %v1751, %v1750
    %v1757 = vpack.c.b16 %v1753, %v1752
    %v1763 = vsel %vm1515, %v1725, 0
    %1765 = vmatpush.bf16.msra.mxu0 0
    %1766 = vmatpush.bf16.msra.mxu0 0
    %1767 = vmatpush.bf16.msra.mxu0 0
    %1768 = vmatpush.bf16.msra.mxu0 0
    %1769 = vmatpush.bf16.msra.mxu0 %v1757
    %1770 = vmatpush.bf16.msra.mxu0 %v1756
    %1771 = vmatpush.bf16.msra.mxu0 %v1755
    %1772 = vmatpush.bf16.msra.mxu0 %v1754
    %1773 = vmatmul.bf16.gmra.mxu0 %v1763
    %v1774 = vpop.f32.mrf.mxu0
    %v1775 = vadd.f32 %v1736, %v1774
    %v1776 = vpop.f32.mrf.mxu0
    %1777 = vdwg.mxu0
    %v1778 = vxor.u32 %v1775, 2147483648
    %v1779 = vmul.f32 %v1778, 1.442695
    %v1780 = vpow.pop %v1779
    %v1781 = vadd.f32 %v1780, 1.0
    %v1782 = vrcp.pop %v1781
    %v1783 = vmul.f32 %v1781, %v1782
    %v1784 = vsub.f32 1.0, %v1783
    %v1785 = vmul.f32 %v1782, %v1784
    %v1786 = vadd.f32 %v1782, %v1785
    %vm1787 = vweird.f32 %v1781
    %vm1788 = vweird.f32 %v1782
    %vm1789 = vmor %vm1787, %vm1788
    %v1790 = vsel %vm1789, %v1782, %v1786
    %v1791 = vand.u32 2147483647, %v1781
    %vm1792 = vcmp.eq.f32.partialorder %v1791, 8.507059e+37
    %v1793 = vand.u32 %v1781, 2147483648
    %v1794 = vor.u32 1.1754944e-38, %v1793
    %v1795 = vsel %vm1792, %v1794, %v1790
    %v1796 = vmul.f32 1.0, %v1795
    %vm1797 = vcmask 23552
    %1798 = vst.msk [vmem:[%s13] sm:$0xff] %vm1797, %v1796
    // Predicated region
    $region74: #{tpu_custom_call.1} parent=1 // pred_check
      _
    $region75: #{tpu_custom_call.1} parent=1 // pred_check_branch
      %1800 = sbr.rel (0) target = $region77
    $region76: #{tpu_custom_call.1} parent=1 // pred_region
      _
    $region77: #{tpu_custom_call.1} parent=1 // pred_fallthru
      _
    // Predicated region
    $region78: #{tpu_custom_call.1} parent=1 // pred_check
      _
    $region79: #{tpu_custom_call.1} parent=1 // pred_check_branch
      %1802 = sbr.rel (0) target = $region81
    $region80: #{tpu_custom_call.1} parent=1 // pred_region
      _
    $region81: #{tpu_custom_call.1} parent=1 // pred_fallthru
      _
    %1803 = vsyncpa [#allocation5], 1
    %1804 = vsyncpa [#allocation7], 1
    %1805 = vsyncpa [#allocation10], 1

</llo_original>
